<compile_context>
chip_gen: v5e
topology: v5e:2x2
jax: 0.10.0
libtpu: 0.0.40
codegen_flags: <defaults>
</compile_context>

<pallas_src>
import functools
import math

import jax
import jax.numpy as jnp
import numpy as np
from jax.experimental import pallas as pl
from jax.experimental.pallas import tpu as pltpu


# ----------------------------------------------------------------------------
# Pallas kernel: one grid step processes a block of `Bblk` batch elements
# end-to-end.
# ----------------------------------------------------------------------------
def _decoder_kernel(
    x_ref,
    wqkv1, wo1,            # attention 1: fused (E,3E) QKV weight, (E,E) out weight
    wqkv2, wo2,            # attention 2
    wf1, wf2,              # feed-forward weights (E,HF), (HF,E)
    bqkv_ref,              # (2, 3E) fused QKV biases for both attention blocks
    bf1_ref,               # (1, HF) FFN hidden bias
    vec_ref,               # (9, E): bo1, bo2, bf2, g1, be1, g2, be2, g3, be3
    out_ref,
    *, num_heads, head_dim,
):
    Bblk, S, E = x_ref.shape
    H, hd = num_heads, head_dim
    scale = 1.0 / math.sqrt(hd)

    x = x_ref[...].astype(jnp.float32)          # (Bblk, S, E)
    vecs = vec_ref[...]                         # (9, E) f32, loaded once
    bqkv = bqkv_ref[...]                        # (2, 3E) f32, loaded once

    def layernorm(h, idx):                      # h: (Bblk, S, E) f32
        g = vecs[3 + 2 * idx]                   # (E,)
        b = vecs[4 + 2 * idx]
        mu = jnp.mean(h, axis=-1, keepdims=True)
        var = jnp.mean((h - mu) * (h - mu), axis=-1, keepdims=True)
        return (h - mu) * jax.lax.rsqrt(var + 1e-5) * g + b

    def mha(h, wqkv_ref, wo_ref, bq, bo):
        # --- fused full-width QKV projection: one (Bblk*S, E) @ (E, 3E) ---
        h2 = h.reshape(Bblk * S, E).astype(jnp.bfloat16)
        qkv = jnp.dot(h2, wqkv_ref[...],
                      preferred_element_type=jnp.float32) + bq     # (Bblk*S, 3E)
        qkv = qkv.reshape(Bblk, S, 3 * E)

        def gather_heads(base):
            # split heads along lanes and fold them into one leading batch dim
            # (H*Bblk); only needed for the score/context matmuls which
            # inherently contract over hd.
            return jnp.concatenate(
                [qkv[:, :, base + hh * hd: base + (hh + 1) * hd]
                 for hh in range(H)], axis=0).astype(jnp.bfloat16)

        q = gather_heads(0)            # (H*Bblk, S, hd)
        k = gather_heads(E)
        v = gather_heads(2 * E)

        # scores + stable softmax in f32 (single batched matmul over H*Bblk)
        s = jnp.einsum("bqd,bkd->bqk", q, k,
                       preferred_element_type=jnp.float32) * scale
        s = s - jnp.max(s, axis=-1, keepdims=True)
        e = jnp.exp(s)
        p = e * pl.reciprocal(jnp.sum(e, axis=-1, keepdims=True), approx=True)
        o = jnp.einsum("bqk,bkd->bqd", p.astype(jnp.bfloat16), v,
                       preferred_element_type=jnp.float32)         # (H*Bblk, S, hd)

        # reassemble heads along lanes -> (Bblk, S, E); the head reduction is
        # folded into the single (E, E) output-projection contraction (K = E).
        ctx = jnp.concatenate(
            [o[hh * Bblk:(hh + 1) * Bblk] for hh in range(H)], axis=-1)
        attn = jnp.dot(ctx.reshape(Bblk * S, E).astype(jnp.bfloat16), wo_ref[...],
                       preferred_element_type=jnp.float32) + bo
        return attn.reshape(Bblk, S, E)

    # --- self-attention block 1 (mask=None) + residual + LayerNorm ---
    x = layernorm(x + mha(x, wqkv1, wo1, bqkv[0], vecs[0]), 0)
    # --- self-attention block 2 (mask=None) + residual + LayerNorm ---
    x = layernorm(x + mha(x, wqkv2, wo2, bqkv[1], vecs[1]), 1)
    # --- positionwise feed-forward + residual + LayerNorm ---
    x2 = x.reshape(Bblk * S, E).astype(jnp.bfloat16)   # batch folded into M dim
    hdn = jnp.dot(x2, wf1[...], preferred_element_type=jnp.float32) + bf1_ref[0]
    hdn = jnp.maximum(hdn, 0.0)
    ff = jnp.dot(hdn.astype(jnp.bfloat16), wf2[...],
                 preferred_element_type=jnp.float32) + vecs[2]
    x = layernorm(x + ff.reshape(Bblk, S, E), 2)

    out_ref[...] = x.astype(out_ref.dtype)


# ----------------------------------------------------------------------------
# Wrapper: packs/fuses parameters (pure JAX), casts matmul weights to bf16,
# and launches one pallas_call over batch blocks.
# ----------------------------------------------------------------------------
def decoder_layer(x, params, *, num_heads, batch_block=None,
                  vmem_limit_bytes=32 * 1024 * 1024):
    B, S, E = x.shape
    assert E % num_heads == 0
    hd = E // num_heads
    if batch_block is None:
        # >= 2 'parallel' grid steps when possible so v7x's 2 TCs both work.
        batch_block = B // 2 if (B >= 2 and B % 2 == 0) else B
    Bblk = batch_block
    assert B % Bblk == 0

    bf16, f32 = jnp.bfloat16, jnp.float32

    def fused_qkv_w(i):
        return jnp.concatenate(
            [params[f"wq{i}"], params[f"wk{i}"], params[f"wv{i}"]],
            axis=1).astype(bf16)                                    # (E, 3E)

    def fused_qkv_b(i):
        return jnp.concatenate(
            [params[f"bq{i}"], params[f"bk{i}"], params[f"bv{i}"]], axis=1)

    wqkv1, wqkv2 = fused_qkv_w(1), fused_qkv_w(2)
    wo1 = params["wo1"].astype(bf16)
    wo2 = params["wo2"].astype(bf16)
    wf1 = params["wf1"].astype(bf16)
    wf2 = params["wf2"].astype(bf16)
    bqkv = jnp.concatenate([fused_qkv_b(1), fused_qkv_b(2)], axis=0).astype(f32)
    bf1 = params["bf1"].astype(f32)
    vecs = jnp.concatenate(
        [params["bo1"], params["bo2"], params["bf2"],
         params["g1"], params["be1"], params["g2"], params["be2"],
         params["g3"], params["be3"]], axis=0).astype(f32)          # (9, E)

    args = [wqkv1, wo1, wqkv2, wo2, wf1, wf2, bqkv, bf1, vecs]

    def full_spec(a):
        nd = a.ndim
        return pl.BlockSpec(a.shape, lambda b, _nd=nd: (0,) * _nd)  # grid-invariant

    in_specs = [pl.BlockSpec((Bblk, S, E), lambda b: (b, 0, 0))]
    in_specs += [full_spec(a) for a in args]

    kernel = functools.partial(_decoder_kernel, num_heads=num_heads, head_dim=hd)
    return pl.pallas_call(
        kernel,
        out_shape=jax.ShapeDtypeStruct((B, S, E), x.dtype),
        grid_spec=pltpu.PrefetchScalarGridSpec(
            num_scalar_prefetch=0,
            grid=(B // Bblk,),
            in_specs=in_specs,
            out_specs=pl.BlockSpec((Bblk, S, E), lambda b: (b, 0, 0)),
        ),
        compiler_params=pltpu.CompilerParams(
            dimension_semantics=("parallel",),
            vmem_limit_bytes=vmem_limit_bytes),
    )(x, *args)


# ----------------------------------------------------------------------------
# Pure-JAX f32 reference (same math) for a correctness check
# ----------------------------------------------------------------------------
def decoder_layer_ref(x, p, *, num_heads):
    B, S, E = x.shape
    hd = E // num_heads

    def ln(h, g, b):
        mu = jnp.mean(h, -1, keepdims=True)
        var = jnp.mean((h - mu) ** 2, -1, keepdims=True)
        return (h - mu) / jnp.sqrt(var + 1e-5) * g[0] + b[0]

    def mha(h, wq, bq, wk, bk, wv, bv, wo, bo):
        q = h @ wq + bq[0]
        k = h @ wk + bk[0]
        v = h @ wv + bv[0]
        q = q.reshape(B, S, num_heads, hd).transpose(0, 2, 1, 3)
        k = k.reshape(B, S, num_heads, hd).transpose(0, 2, 1, 3)
        v = v.reshape(B, S, num_heads, hd).transpose(0, 2, 1, 3)
        s = jnp.einsum("bhqd,bhkd->bhqk", q, k) / math.sqrt(hd)
        a = jax.nn.softmax(s, axis=-1)
        o = jnp.einsum("bhqk,bhkd->bhqd", a, v).transpose(0, 2, 1, 3).reshape(B, S, E)
        return o @ wo + bo[0]

    x = ln(x + mha(x, p["wq1"], p["bq1"], p["wk1"], p["bk1"], p["wv1"], p["bv1"], p["wo1"], p["bo1"]), p["g1"], p["be1"])
    x = ln(x + mha(x, p["wq2"], p["bq2"], p["wk2"], p["bk2"], p["wv2"], p["bv2"], p["wo2"], p["bo2"]), p["g2"], p["be2"])
    ff = jnp.maximum(x @ p["wf1"] + p["bf1"][0], 0.0) @ p["wf2"] + p["bf2"][0]
    return ln(x + ff, p["g3"], p["be3"])


# ----------------------------------------------------------------------------
# Main
# ----------------------------------------------------------------------------
if __name__ == "__main__":
    # embed_dim == input_dim (required by nn.LayerNorm(input_dim) in original)
    B, S, E, H = 2, 32, 32, 4
    HF = 2 * E  # FFN hidden

    key = jax.random.PRNGKey(0)
    keys = jax.random.split(key, 40)
    ki = iter(range(40))

    def w(shape):
        return jax.random.normal(keys[next(ki)], shape, jnp.float32) * 0.02

    params = {}
    for blk in ("1", "2"):
        for name in ("q", "k", "v", "o"):
            params[f"w{name}{blk}"] = w((E, E))
            params[f"b{name}{blk}"] = w((1, E))
    params["wf1"] = w((E, HF))
    params["bf1"] = w((1, HF))
    params["wf2"] = w((HF, E))
    params["bf2"] = w((1, E))
    for i in ("1", "2", "3"):
        params[f"g{i}"] = jnp.ones((1, E), jnp.float32)
        params[f"be{i}"] = jnp.zeros((1, E), jnp.float32)

    x = jax.random.normal(keys[next(ki)], (B, S, E), jnp.float32)

    out = jax.block_until_ready(decoder_layer(x, params, num_heads=H))
    ref = decoder_layer_ref(x, params, num_heads=H)

    # bf16 matmul operands (f32 accumulation) + approx reciprocal => looser
    # tolerance than a pure-f32 implementation.
    np.testing.assert_allclose(np.asarray(out), np.asarray(ref), rtol=2e-2, atol=2e-2)

    print("KERNEL_OK")
</pallas_src>

<mosaic_0001>
module attributes {stable_mosaic.version = 11 : i64} {
  func.func @_decoder_kernel(%arg0: i32, %arg1: memref<1x32x32xf32, #tpu.memory_space<vmem>>, %arg2: memref<32x96xbf16, #tpu.memory_space<vmem>>, %arg3: memref<32x32xbf16, #tpu.memory_space<vmem>>, %arg4: memref<32x96xbf16, #tpu.memory_space<vmem>>, %arg5: memref<32x32xbf16, #tpu.memory_space<vmem>>, %arg6: memref<32x64xbf16, #tpu.memory_space<vmem>>, %arg7: memref<64x32xbf16, #tpu.memory_space<vmem>>, %arg8: memref<2x96xf32, #tpu.memory_space<vmem>>, %arg9: memref<1x64xf32, #tpu.memory_space<vmem>>, %arg10: memref<9x32xf32, #tpu.memory_space<vmem>>, %arg11: memref<1x32x32xf32, #tpu.memory_space<vmem>>) attributes {dimension_semantics = [#tpu.dimension_semantics<parallel>], iteration_bounds = array<i64: 2>, scalar_prefetch = 0 : i64, scratch_operands = 0 : i64, tpu.core_type = #tpu.core_type<tc>, window_params = [{transform_indices = @transform_0, window_bounds = array<i64: 1, 32, 32>}, {pipeline_mode = #tpu.pipeline_mode<synchronous>, transform_indices = @transform_1, window_bounds = array<i64: 32, 96>}, {pipeline_mode = #tpu.pipeline_mode<synchronous>, transform_indices = @transform_2, window_bounds = array<i64: 32, 32>}, {pipeline_mode = #tpu.pipeline_mode<synchronous>, transform_indices = @transform_3, window_bounds = array<i64: 32, 96>}, {pipeline_mode = #tpu.pipeline_mode<synchronous>, transform_indices = @transform_4, window_bounds = array<i64: 32, 32>}, {pipeline_mode = #tpu.pipeline_mode<synchronous>, transform_indices = @transform_5, window_bounds = array<i64: 32, 64>}, {pipeline_mode = #tpu.pipeline_mode<synchronous>, transform_indices = @transform_6, window_bounds = array<i64: 64, 32>}, {pipeline_mode = #tpu.pipeline_mode<synchronous>, transform_indices = @transform_7, window_bounds = array<i64: 2, 96>}, {pipeline_mode = #tpu.pipeline_mode<synchronous>, transform_indices = @transform_8, window_bounds = array<i64: 1, 64>}, {pipeline_mode = #tpu.pipeline_mode<synchronous>, transform_indices = @transform_9, window_bounds = array<i64: 9, 32>}, {transform_indices = @transform_10, window_bounds = array<i64: 1, 32, 32>}]} {
    %c0 = arith.constant 0 : index
    %c0_0 = arith.constant 0 : index
    %c0_1 = arith.constant 0 : index
    %0 = vector.load %arg1[%c0, %c0_0, %c0_1] : memref<1x32x32xf32, #tpu.memory_space<vmem>>, vector<1x32x32xf32>
    %c0_2 = arith.constant 0 : index
    %c0_3 = arith.constant 0 : index
    %1 = vector.load %arg10[%c0_2, %c0_3] : memref<9x32xf32, #tpu.memory_space<vmem>>, vector<9x32xf32>
    %c0_4 = arith.constant 0 : index
    %c0_5 = arith.constant 0 : index
    %2 = vector.load %arg8[%c0_4, %c0_5] : memref<2x96xf32, #tpu.memory_space<vmem>>, vector<2x96xf32>
    %3 = vector.extract_strided_slice %2 {offsets = [0, 0], sizes = [1, 96], strides = [1, 1]} : vector<2x96xf32> to vector<1x96xf32>
    %4 = vector.shape_cast %3 : vector<1x96xf32> to vector<96xf32>
    %5 = vector.extract_strided_slice %1 {offsets = [0, 0], sizes = [1, 32], strides = [1, 1]} : vector<9x32xf32> to vector<1x32xf32>
    %6 = vector.shape_cast %5 : vector<1x32xf32> to vector<32xf32>
    %7 = vector.shape_cast %0 : vector<1x32x32xf32> to vector<32x32xf32>
    %8 = arith.truncf %7 : vector<32x32xf32> to vector<32x32xbf16>
    %c0_6 = arith.constant 0 : index
    %c0_7 = arith.constant 0 : index
    %9 = vector.load %arg2[%c0_6, %c0_7] : memref<32x96xbf16, #tpu.memory_space<vmem>>, vector<32x96xbf16>
    %cst = arith.constant dense<0.000000e+00> : vector<32x96xf32>
    %10 = tpu.matmul %8, %9, %cst {dimension_numbers = #tpu.dot_dimension_numbers<[1], [0], [0], [1], [0, 0, 1, 1], [], []>} : vector<32x32xbf16>, vector<32x96xbf16>, vector<32x96xf32> -> vector<32x96xf32>
    %11 = vector.shape_cast %4 : vector<96xf32> to vector<1x96xf32>
    %12 = vector.broadcast %11 : vector<1x96xf32> to vector<32x96xf32>
    %13 = arith.addf %10, %12 : vector<32x96xf32>
    %14 = vector.shape_cast %13 : vector<32x96xf32> to vector<1x32x96xf32>
    %15 = vector.extract_strided_slice %14 {offsets = [0, 0, 0], sizes = [1, 32, 8], strides = [1, 1, 1]} : vector<1x32x96xf32> to vector<1x32x8xf32>
    %16 = vector.extract_strided_slice %14 {offsets = [0, 0, 8], sizes = [1, 32, 8], strides = [1, 1, 1]} : vector<1x32x96xf32> to vector<1x32x8xf32>
    %17 = vector.extract_strided_slice %14 {offsets = [0, 0, 16], sizes = [1, 32, 8], strides = [1, 1, 1]} : vector<1x32x96xf32> to vector<1x32x8xf32>
    %18 = vector.extract_strided_slice %14 {offsets = [0, 0, 24], sizes = [1, 32, 8], strides = [1, 1, 1]} : vector<1x32x96xf32> to vector<1x32x8xf32>
    %19 = tpu.concatenate %15, %16, %17, %18 in 0 : vector<1x32x8xf32>, vector<1x32x8xf32>, vector<1x32x8xf32>, vector<1x32x8xf32> -> vector<4x32x8xf32>
    %20 = arith.truncf %19 : vector<4x32x8xf32> to vector<4x32x8xbf16>
    %21 = vector.extract_strided_slice %14 {offsets = [0, 0, 32], sizes = [1, 32, 8], strides = [1, 1, 1]} : vector<1x32x96xf32> to vector<1x32x8xf32>
    %22 = vector.extract_strided_slice %14 {offsets = [0, 0, 40], sizes = [1, 32, 8], strides = [1, 1, 1]} : vector<1x32x96xf32> to vector<1x32x8xf32>
    %23 = vector.extract_strided_slice %14 {offsets = [0, 0, 48], sizes = [1, 32, 8], strides = [1, 1, 1]} : vector<1x32x96xf32> to vector<1x32x8xf32>
    %24 = vector.extract_strided_slice %14 {offsets = [0, 0, 56], sizes = [1, 32, 8], strides = [1, 1, 1]} : vector<1x32x96xf32> to vector<1x32x8xf32>
    %25 = tpu.concatenate %21, %22, %23, %24 in 0 : vector<1x32x8xf32>, vector<1x32x8xf32>, vector<1x32x8xf32>, vector<1x32x8xf32> -> vector<4x32x8xf32>
    %26 = arith.truncf %25 : vector<4x32x8xf32> to vector<4x32x8xbf16>
    %27 = vector.extract_strided_slice %14 {offsets = [0, 0, 64], sizes = [1, 32, 8], strides = [1, 1, 1]} : vector<1x32x96xf32> to vector<1x32x8xf32>
    %28 = vector.extract_strided_slice %14 {offsets = [0, 0, 72], sizes = [1, 32, 8], strides = [1, 1, 1]} : vector<1x32x96xf32> to vector<1x32x8xf32>
    %29 = vector.extract_strided_slice %14 {offsets = [0, 0, 80], sizes = [1, 32, 8], strides = [1, 1, 1]} : vector<1x32x96xf32> to vector<1x32x8xf32>
    %30 = vector.extract_strided_slice %14 {offsets = [0, 0, 88], sizes = [1, 32, 8], strides = [1, 1, 1]} : vector<1x32x96xf32> to vector<1x32x8xf32>
    %31 = tpu.concatenate %27, %28, %29, %30 in 0 : vector<1x32x8xf32>, vector<1x32x8xf32>, vector<1x32x8xf32>, vector<1x32x8xf32> -> vector<4x32x8xf32>
    %32 = arith.truncf %31 : vector<4x32x8xf32> to vector<4x32x8xbf16>
    "tpu.trace_start"() <{level = 10 : i32, message = "bqd,bkd->bqk"}> : () -> ()
    %cst_8 = arith.constant dense<0.000000e+00> : vector<4x32x32xf32>
    %33 = tpu.matmul %20, %26, %cst_8 {dimension_numbers = #tpu.dot_dimension_numbers<[2], [2], [1], [1], [0, 0, 0, 1, 1, 1], [0], [0]>} : vector<4x32x8xbf16>, vector<4x32x8xbf16>, vector<4x32x32xf32> -> vector<4x32x32xf32>
    "tpu.trace_stop"() : () -> ()
    %cst_9 = arith.constant 0.353553385 : f32
    %34 = vector.broadcast %cst_9 : f32 to vector<4x32x32xf32>
    %35 = arith.mulf %33, %34 : vector<4x32x32xf32>
    %cst_10 = arith.constant dense<0xFF800000> : vector<4x32xf32>
    %36 = vector.multi_reduction <maximumf>, %35, %cst_10 [2] : vector<4x32x32xf32> to vector<4x32xf32>
    %37 = vector.shape_cast %36 : vector<4x32xf32> to vector<4x32x1xf32>
    %38 = vector.broadcast %37 : vector<4x32x1xf32> to vector<4x32x32xf32>
    %39 = arith.subf %35, %38 : vector<4x32x32xf32>
    %40 = math.exp %39 : vector<4x32x32xf32>
    %cst_11 = arith.constant dense<0.000000e+00> : vector<4x32xf32>
    %41 = vector.multi_reduction <add>, %40, %cst_11 [2] : vector<4x32x32xf32> to vector<4x32xf32>
    %42 = vector.shape_cast %41 : vector<4x32xf32> to vector<4x32x1xf32>
    %43 = tpu.reciprocal %42 {approx = true} : vector<4x32x1xf32> -> vector<4x32x1xf32>
    %44 = vector.broadcast %43 : vector<4x32x1xf32> to vector<4x32x32xf32>
    %45 = arith.mulf %40, %44 : vector<4x32x32xf32>
    %46 = arith.truncf %45 : vector<4x32x32xf32> to vector<4x32x32xbf16>
    "tpu.trace_start"() <{level = 10 : i32, message = "bqk,bkd->bqd"}> : () -> ()
    %cst_12 = arith.constant dense<0.000000e+00> : vector<4x32x8xf32>
    %47 = tpu.matmul %46, %32, %cst_12 {dimension_numbers = #tpu.dot_dimension_numbers<[2], [1], [1], [2], [0, 0, 0, 1, 1, 2], [0], [0]>} : vector<4x32x32xbf16>, vector<4x32x8xbf16>, vector<4x32x8xf32> -> vector<4x32x8xf32>
    "tpu.trace_stop"() : () -> ()
    %48 = vector.extract_strided_slice %47 {offsets = [0, 0, 0], sizes = [1, 32, 8], strides = [1, 1, 1]} : vector<4x32x8xf32> to vector<1x32x8xf32>
    %49 = vector.extract_strided_slice %47 {offsets = [1, 0, 0], sizes = [1, 32, 8], strides = [1, 1, 1]} : vector<4x32x8xf32> to vector<1x32x8xf32>
    %50 = vector.extract_strided_slice %47 {offsets = [2, 0, 0], sizes = [1, 32, 8], strides = [1, 1, 1]} : vector<4x32x8xf32> to vector<1x32x8xf32>
    %51 = vector.extract_strided_slice %47 {offsets = [3, 0, 0], sizes = [1, 32, 8], strides = [1, 1, 1]} : vector<4x32x8xf32> to vector<1x32x8xf32>
    %52 = tpu.concatenate %48, %49, %50, %51 in 2 : vector<1x32x8xf32>, vector<1x32x8xf32>, vector<1x32x8xf32>, vector<1x32x8xf32> -> vector<1x32x32xf32>
    %53 = vector.shape_cast %52 : vector<1x32x32xf32> to vector<32x32xf32>
    %54 = arith.truncf %53 : vector<32x32xf32> to vector<32x32xbf16>
    %c0_13 = arith.constant 0 : index
    %c0_14 = arith.constant 0 : index
    %55 = vector.load %arg3[%c0_13, %c0_14] : memref<32x32xbf16, #tpu.memory_space<vmem>>, vector<32x32xbf16>
    %cst_15 = arith.constant dense<0.000000e+00> : vector<32x32xf32>
    %56 = tpu.matmul %54, %55, %cst_15 {dimension_numbers = #tpu.dot_dimension_numbers<[1], [0], [0], [1], [0, 0, 1, 1], [], []>} : vector<32x32xbf16>, vector<32x32xbf16>, vector<32x32xf32> -> vector<32x32xf32>
    %57 = vector.shape_cast %6 : vector<32xf32> to vector<1x32xf32>
    %58 = vector.broadcast %57 : vector<1x32xf32> to vector<32x32xf32>
    %59 = arith.addf %56, %58 : vector<32x32xf32>
    %60 = vector.shape_cast %59 : vector<32x32xf32> to vector<1x32x32xf32>
    %61 = arith.addf %0, %60 : vector<1x32x32xf32>
    %62 = vector.extract_strided_slice %1 {offsets = [3, 0], sizes = [1, 32], strides = [1, 1]} : vector<9x32xf32> to vector<1x32xf32>
    %63 = vector.shape_cast %62 : vector<1x32xf32> to vector<32xf32>
    %64 = vector.extract_strided_slice %1 {offsets = [4, 0], sizes = [1, 32], strides = [1, 1]} : vector<9x32xf32> to vector<1x32xf32>
    %65 = vector.shape_cast %64 : vector<1x32xf32> to vector<32xf32>
    %cst_16 = arith.constant dense<0.000000e+00> : vector<1x32xf32>
    %66 = vector.multi_reduction <add>, %61, %cst_16 [2] : vector<1x32x32xf32> to vector<1x32xf32>
    %67 = vector.shape_cast %66 : vector<1x32xf32> to vector<1x32x1xf32>
    %cst_17 = arith.constant 3.200000e+01 : f32
    %68 = vector.broadcast %cst_17 : f32 to vector<1x32x1xf32>
    %69 = arith.divf %67, %68 : vector<1x32x1xf32>
    %70 = vector.broadcast %69 : vector<1x32x1xf32> to vector<1x32x32xf32>
    %71 = arith.subf %61, %70 : vector<1x32x32xf32>
    %72 = vector.broadcast %69 : vector<1x32x1xf32> to vector<1x32x32xf32>
    %73 = arith.subf %61, %72 : vector<1x32x32xf32>
    %74 = arith.mulf %71, %73 : vector<1x32x32xf32>
    %cst_18 = arith.constant dense<0.000000e+00> : vector<1x32xf32>
    %75 = vector.multi_reduction <add>, %74, %cst_18 [2] : vector<1x32x32xf32> to vector<1x32xf32>
    %76 = vector.shape_cast %75 : vector<1x32xf32> to vector<1x32x1xf32>
    %cst_19 = arith.constant 3.200000e+01 : f32
    %77 = vector.broadcast %cst_19 : f32 to vector<1x32x1xf32>
    %78 = arith.divf %76, %77 : vector<1x32x1xf32>
    %79 = vector.broadcast %69 : vector<1x32x1xf32> to vector<1x32x32xf32>
    %80 = arith.subf %61, %79 : vector<1x32x32xf32>
    %cst_20 = arith.constant 9.99999974E-6 : f32
    %81 = vector.broadcast %cst_20 : f32 to vector<1x32x1xf32>
    %82 = arith.addf %78, %81 : vector<1x32x1xf32>
    %83 = math.rsqrt %82 : vector<1x32x1xf32>
    %84 = vector.broadcast %83 : vector<1x32x1xf32> to vector<1x32x32xf32>
    %85 = arith.mulf %80, %84 : vector<1x32x32xf32>
    %86 = vector.shape_cast %63 : vector<32xf32> to vector<1x1x32xf32>
    %87 = vector.broadcast %86 : vector<1x1x32xf32> to vector<1x32x32xf32>
    %88 = arith.mulf %85, %87 : vector<1x32x32xf32>
    %89 = vector.shape_cast %65 : vector<32xf32> to vector<1x1x32xf32>
    %90 = vector.broadcast %89 : vector<1x1x32xf32> to vector<1x32x32xf32>
    %91 = arith.addf %88, %90 : vector<1x32x32xf32>
    %92 = vector.extract_strided_slice %2 {offsets = [1, 0], sizes = [1, 96], strides = [1, 1]} : vector<2x96xf32> to vector<1x96xf32>
    %93 = vector.shape_cast %92 : vector<1x96xf32> to vector<96xf32>
    %94 = vector.extract_strided_slice %1 {offsets = [1, 0], sizes = [1, 32], strides = [1, 1]} : vector<9x32xf32> to vector<1x32xf32>
    %95 = vector.shape_cast %94 : vector<1x32xf32> to vector<32xf32>
    %96 = vector.shape_cast %91 : vector<1x32x32xf32> to vector<32x32xf32>
    %97 = arith.truncf %96 : vector<32x32xf32> to vector<32x32xbf16>
    %c0_21 = arith.constant 0 : index
    %c0_22 = arith.constant 0 : index
    %98 = vector.load %arg4[%c0_21, %c0_22] : memref<32x96xbf16, #tpu.memory_space<vmem>>, vector<32x96xbf16>
    %cst_23 = arith.constant dense<0.000000e+00> : vector<32x96xf32>
    %99 = tpu.matmul %97, %98, %cst_23 {dimension_numbers = #tpu.dot_dimension_numbers<[1], [0], [0], [1], [0, 0, 1, 1], [], []>} : vector<32x32xbf16>, vector<32x96xbf16>, vector<32x96xf32> -> vector<32x96xf32>
    %100 = vector.shape_cast %93 : vector<96xf32> to vector<1x96xf32>
    %101 = vector.broadcast %100 : vector<1x96xf32> to vector<32x96xf32>
    %102 = arith.addf %99, %101 : vector<32x96xf32>
    %103 = vector.shape_cast %102 : vector<32x96xf32> to vector<1x32x96xf32>
    %104 = vector.extract_strided_slice %103 {offsets = [0, 0, 0], sizes = [1, 32, 8], strides = [1, 1, 1]} : vector<1x32x96xf32> to vector<1x32x8xf32>
    %105 = vector.extract_strided_slice %103 {offsets = [0, 0, 8], sizes = [1, 32, 8], strides = [1, 1, 1]} : vector<1x32x96xf32> to vector<1x32x8xf32>
    %106 = vector.extract_strided_slice %103 {offsets = [0, 0, 16], sizes = [1, 32, 8], strides = [1, 1, 1]} : vector<1x32x96xf32> to vector<1x32x8xf32>
    %107 = vector.extract_strided_slice %103 {offsets = [0, 0, 24], sizes = [1, 32, 8], strides = [1, 1, 1]} : vector<1x32x96xf32> to vector<1x32x8xf32>
    %108 = tpu.concatenate %104, %105, %106, %107 in 0 : vector<1x32x8xf32>, vector<1x32x8xf32>, vector<1x32x8xf32>, vector<1x32x8xf32> -> vector<4x32x8xf32>
    %109 = arith.truncf %108 : vector<4x32x8xf32> to vector<4x32x8xbf16>
    %110 = vector.extract_strided_slice %103 {offsets = [0, 0, 32], sizes = [1, 32, 8], strides = [1, 1, 1]} : vector<1x32x96xf32> to vector<1x32x8xf32>
    %111 = vector.extract_strided_slice %103 {offsets = [0, 0, 40], sizes = [1, 32, 8], strides = [1, 1, 1]} : vector<1x32x96xf32> to vector<1x32x8xf32>
    %112 = vector.extract_strided_slice %103 {offsets = [0, 0, 48], sizes = [1, 32, 8], strides = [1, 1, 1]} : vector<1x32x96xf32> to vector<1x32x8xf32>
    %113 = vector.extract_strided_slice %103 {offsets = [0, 0, 56], sizes = [1, 32, 8], strides = [1, 1, 1]} : vector<1x32x96xf32> to vector<1x32x8xf32>
    %114 = tpu.concatenate %110, %111, %112, %113 in 0 : vector<1x32x8xf32>, vector<1x32x8xf32>, vector<1x32x8xf32>, vector<1x32x8xf32> -> vector<4x32x8xf32>
    %115 = arith.truncf %114 : vector<4x32x8xf32> to vector<4x32x8xbf16>
    %116 = vector.extract_strided_slice %103 {offsets = [0, 0, 64], sizes = [1, 32, 8], strides = [1, 1, 1]} : vector<1x32x96xf32> to vector<1x32x8xf32>
    %117 = vector.extract_strided_slice %103 {offsets = [0, 0, 72], sizes = [1, 32, 8], strides = [1, 1, 1]} : vector<1x32x96xf32> to vector<1x32x8xf32>
    %118 = vector.extract_strided_slice %103 {offsets = [0, 0, 80], sizes = [1, 32, 8], strides = [1, 1, 1]} : vector<1x32x96xf32> to vector<1x32x8xf32>
    %119 = vector.extract_strided_slice %103 {offsets = [0, 0, 88], sizes = [1, 32, 8], strides = [1, 1, 1]} : vector<1x32x96xf32> to vector<1x32x8xf32>
    %120 = tpu.concatenate %116, %117, %118, %119 in 0 : vector<1x32x8xf32>, vector<1x32x8xf32>, vector<1x32x8xf32>, vector<1x32x8xf32> -> vector<4x32x8xf32>
    %121 = arith.truncf %120 : vector<4x32x8xf32> to vector<4x32x8xbf16>
    "tpu.trace_start"() <{level = 10 : i32, message = "bqd,bkd->bqk"}> : () -> ()
    %cst_24 = arith.constant dense<0.000000e+00> : vector<4x32x32xf32>
    %122 = tpu.matmul %109, %115, %cst_24 {dimension_numbers = #tpu.dot_dimension_numbers<[2], [2], [1], [1], [0, 0, 0, 1, 1, 1], [0], [0]>} : vector<4x32x8xbf16>, vector<4x32x8xbf16>, vector<4x32x32xf32> -> vector<4x32x32xf32>
    "tpu.trace_stop"() : () -> ()
    %cst_25 = arith.constant 0.353553385 : f32
    %123 = vector.broadcast %cst_25 : f32 to vector<4x32x32xf32>
    %124 = arith.mulf %122, %123 : vector<4x32x32xf32>
    %cst_26 = arith.constant dense<0xFF800000> : vector<4x32xf32>
    %125 = vector.multi_reduction <maximumf>, %124, %cst_26 [2] : vector<4x32x32xf32> to vector<4x32xf32>
    %126 = vector.shape_cast %125 : vector<4x32xf32> to vector<4x32x1xf32>
    %127 = vector.broadcast %126 : vector<4x32x1xf32> to vector<4x32x32xf32>
    %128 = arith.subf %124, %127 : vector<4x32x32xf32>
    %129 = math.exp %128 : vector<4x32x32xf32>
    %cst_27 = arith.constant dense<0.000000e+00> : vector<4x32xf32>
    %130 = vector.multi_reduction <add>, %129, %cst_27 [2] : vector<4x32x32xf32> to vector<4x32xf32>
    %131 = vector.shape_cast %130 : vector<4x32xf32> to vector<4x32x1xf32>
    %132 = tpu.reciprocal %131 {approx = true} : vector<4x32x1xf32> -> vector<4x32x1xf32>
    %133 = vector.broadcast %132 : vector<4x32x1xf32> to vector<4x32x32xf32>
    %134 = arith.mulf %129, %133 : vector<4x32x32xf32>
    %135 = arith.truncf %134 : vector<4x32x32xf32> to vector<4x32x32xbf16>
    "tpu.trace_start"() <{level = 10 : i32, message = "bqk,bkd->bqd"}> : () -> ()
    %cst_28 = arith.constant dense<0.000000e+00> : vector<4x32x8xf32>
    %136 = tpu.matmul %135, %121, %cst_28 {dimension_numbers = #tpu.dot_dimension_numbers<[2], [1], [1], [2], [0, 0, 0, 1, 1, 2], [0], [0]>} : vector<4x32x32xbf16>, vector<4x32x8xbf16>, vector<4x32x8xf32> -> vector<4x32x8xf32>
    "tpu.trace_stop"() : () -> ()
    %137 = vector.extract_strided_slice %136 {offsets = [0, 0, 0], sizes = [1, 32, 8], strides = [1, 1, 1]} : vector<4x32x8xf32> to vector<1x32x8xf32>
    %138 = vector.extract_strided_slice %136 {offsets = [1, 0, 0], sizes = [1, 32, 8], strides = [1, 1, 1]} : vector<4x32x8xf32> to vector<1x32x8xf32>
    %139 = vector.extract_strided_slice %136 {offsets = [2, 0, 0], sizes = [1, 32, 8], strides = [1, 1, 1]} : vector<4x32x8xf32> to vector<1x32x8xf32>
    %140 = vector.extract_strided_slice %136 {offsets = [3, 0, 0], sizes = [1, 32, 8], strides = [1, 1, 1]} : vector<4x32x8xf32> to vector<1x32x8xf32>
    %141 = tpu.concatenate %137, %138, %139, %140 in 2 : vector<1x32x8xf32>, vector<1x32x8xf32>, vector<1x32x8xf32>, vector<1x32x8xf32> -> vector<1x32x32xf32>
    %142 = vector.shape_cast %141 : vector<1x32x32xf32> to vector<32x32xf32>
    %143 = arith.truncf %142 : vector<32x32xf32> to vector<32x32xbf16>
    %c0_29 = arith.constant 0 : index
    %c0_30 = arith.constant 0 : index
    %144 = vector.load %arg5[%c0_29, %c0_30] : memref<32x32xbf16, #tpu.memory_space<vmem>>, vector<32x32xbf16>
    %cst_31 = arith.constant dense<0.000000e+00> : vector<32x32xf32>
    %145 = tpu.matmul %143, %144, %cst_31 {dimension_numbers = #tpu.dot_dimension_numbers<[1], [0], [0], [1], [0, 0, 1, 1], [], []>} : vector<32x32xbf16>, vector<32x32xbf16>, vector<32x32xf32> -> vector<32x32xf32>
    %146 = vector.shape_cast %95 : vector<32xf32> to vector<1x32xf32>
    %147 = vector.broadcast %146 : vector<1x32xf32> to vector<32x32xf32>
    %148 = arith.addf %145, %147 : vector<32x32xf32>
    %149 = vector.shape_cast %148 : vector<32x32xf32> to vector<1x32x32xf32>
    %150 = arith.addf %91, %149 : vector<1x32x32xf32>
    %151 = vector.extract_strided_slice %1 {offsets = [5, 0], sizes = [1, 32], strides = [1, 1]} : vector<9x32xf32> to vector<1x32xf32>
    %152 = vector.shape_cast %151 : vector<1x32xf32> to vector<32xf32>
    %153 = vector.extract_strided_slice %1 {offsets = [6, 0], sizes = [1, 32], strides = [1, 1]} : vector<9x32xf32> to vector<1x32xf32>
    %154 = vector.shape_cast %153 : vector<1x32xf32> to vector<32xf32>
    %cst_32 = arith.constant dense<0.000000e+00> : vector<1x32xf32>
    %155 = vector.multi_reduction <add>, %150, %cst_32 [2] : vector<1x32x32xf32> to vector<1x32xf32>
    %156 = vector.shape_cast %155 : vector<1x32xf32> to vector<1x32x1xf32>
    %cst_33 = arith.constant 3.200000e+01 : f32
    %157 = vector.broadcast %cst_33 : f32 to vector<1x32x1xf32>
    %158 = arith.divf %156, %157 : vector<1x32x1xf32>
    %159 = vector.broadcast %158 : vector<1x32x1xf32> to vector<1x32x32xf32>
    %160 = arith.subf %150, %159 : vector<1x32x32xf32>
    %161 = vector.broadcast %158 : vector<1x32x1xf32> to vector<1x32x32xf32>
    %162 = arith.subf %150, %161 : vector<1x32x32xf32>
    %163 = arith.mulf %160, %162 : vector<1x32x32xf32>
    %cst_34 = arith.constant dense<0.000000e+00> : vector<1x32xf32>
    %164 = vector.multi_reduction <add>, %163, %cst_34 [2] : vector<1x32x32xf32> to vector<1x32xf32>
    %165 = vector.shape_cast %164 : vector<1x32xf32> to vector<1x32x1xf32>
    %cst_35 = arith.constant 3.200000e+01 : f32
    %166 = vector.broadcast %cst_35 : f32 to vector<1x32x1xf32>
    %167 = arith.divf %165, %166 : vector<1x32x1xf32>
    %168 = vector.broadcast %158 : vector<1x32x1xf32> to vector<1x32x32xf32>
    %169 = arith.subf %150, %168 : vector<1x32x32xf32>
    %cst_36 = arith.constant 9.99999974E-6 : f32
    %170 = vector.broadcast %cst_36 : f32 to vector<1x32x1xf32>
    %171 = arith.addf %167, %170 : vector<1x32x1xf32>
    %172 = math.rsqrt %171 : vector<1x32x1xf32>
    %173 = vector.broadcast %172 : vector<1x32x1xf32> to vector<1x32x32xf32>
    %174 = arith.mulf %169, %173 : vector<1x32x32xf32>
    %175 = vector.shape_cast %152 : vector<32xf32> to vector<1x1x32xf32>
    %176 = vector.broadcast %175 : vector<1x1x32xf32> to vector<1x32x32xf32>
    %177 = arith.mulf %174, %176 : vector<1x32x32xf32>
    %178 = vector.shape_cast %154 : vector<32xf32> to vector<1x1x32xf32>
    %179 = vector.broadcast %178 : vector<1x1x32xf32> to vector<1x32x32xf32>
    %180 = arith.addf %177, %179 : vector<1x32x32xf32>
    %181 = vector.shape_cast %180 : vector<1x32x32xf32> to vector<32x32xf32>
    %182 = arith.truncf %181 : vector<32x32xf32> to vector<32x32xbf16>
    %c0_37 = arith.constant 0 : index
    %c0_38 = arith.constant 0 : index
    %183 = vector.load %arg6[%c0_37, %c0_38] : memref<32x64xbf16, #tpu.memory_space<vmem>>, vector<32x64xbf16>
    %cst_39 = arith.constant dense<0.000000e+00> : vector<32x64xf32>
    %184 = tpu.matmul %182, %183, %cst_39 {dimension_numbers = #tpu.dot_dimension_numbers<[1], [0], [0], [1], [0, 0, 1, 1], [], []>} : vector<32x32xbf16>, vector<32x64xbf16>, vector<32x64xf32> -> vector<32x64xf32>
    %c0_40 = arith.constant 0 : index
    %c0_41 = arith.constant 0 : index
    %185 = vector.load %arg9[%c0_40, %c0_41] : memref<1x64xf32, #tpu.memory_space<vmem>>, vector<1x64xf32>
    %186 = vector.shape_cast %185 : vector<1x64xf32> to vector<64xf32>
    %187 = vector.shape_cast %186 : vector<64xf32> to vector<1x64xf32>
    %188 = vector.broadcast %187 : vector<1x64xf32> to vector<32x64xf32>
    %189 = arith.addf %184, %188 : vector<32x64xf32>
    %cst_42 = arith.constant 0.000000e+00 : f32
    %190 = vector.broadcast %cst_42 : f32 to vector<32x64xf32>
    %191 = arith.maximumf %189, %190 : vector<32x64xf32>
    %192 = arith.truncf %191 : vector<32x64xf32> to vector<32x64xbf16>
    %c0_43 = arith.constant 0 : index
    %c0_44 = arith.constant 0 : index
    %193 = vector.load %arg7[%c0_43, %c0_44] : memref<64x32xbf16, #tpu.memory_space<vmem>>, vector<64x32xbf16>
    %cst_45 = arith.constant dense<0.000000e+00> : vector<32x32xf32>
    %194 = tpu.matmul %192, %193, %cst_45 {dimension_numbers = #tpu.dot_dimension_numbers<[1], [0], [0], [1], [0, 0, 1, 1], [], []>} : vector<32x64xbf16>, vector<64x32xbf16>, vector<32x32xf32> -> vector<32x32xf32>
    %195 = vector.extract_strided_slice %1 {offsets = [2, 0], sizes = [1, 32], strides = [1, 1]} : vector<9x32xf32> to vector<1x32xf32>
    %196 = vector.shape_cast %195 : vector<1x32xf32> to vector<32xf32>
    %197 = vector.shape_cast %196 : vector<32xf32> to vector<1x32xf32>
    %198 = vector.broadcast %197 : vector<1x32xf32> to vector<32x32xf32>
    %199 = arith.addf %194, %198 : vector<32x32xf32>
    %200 = vector.shape_cast %199 : vector<32x32xf32> to vector<1x32x32xf32>
    %201 = arith.addf %180, %200 : vector<1x32x32xf32>
    %202 = vector.extract_strided_slice %1 {offsets = [7, 0], sizes = [1, 32], strides = [1, 1]} : vector<9x32xf32> to vector<1x32xf32>
    %203 = vector.shape_cast %202 : vector<1x32xf32> to vector<32xf32>
    %204 = vector.extract_strided_slice %1 {offsets = [8, 0], sizes = [1, 32], strides = [1, 1]} : vector<9x32xf32> to vector<1x32xf32>
    %205 = vector.shape_cast %204 : vector<1x32xf32> to vector<32xf32>
    %cst_46 = arith.constant dense<0.000000e+00> : vector<1x32xf32>
    %206 = vector.multi_reduction <add>, %201, %cst_46 [2] : vector<1x32x32xf32> to vector<1x32xf32>
    %207 = vector.shape_cast %206 : vector<1x32xf32> to vector<1x32x1xf32>
    %cst_47 = arith.constant 3.200000e+01 : f32
    %208 = vector.broadcast %cst_47 : f32 to vector<1x32x1xf32>
    %209 = arith.divf %207, %208 : vector<1x32x1xf32>
    %210 = vector.broadcast %209 : vector<1x32x1xf32> to vector<1x32x32xf32>
    %211 = arith.subf %201, %210 : vector<1x32x32xf32>
    %212 = vector.broadcast %209 : vector<1x32x1xf32> to vector<1x32x32xf32>
    %213 = arith.subf %201, %212 : vector<1x32x32xf32>
    %214 = arith.mulf %211, %213 : vector<1x32x32xf32>
    %cst_48 = arith.constant dense<0.000000e+00> : vector<1x32xf32>
    %215 = vector.multi_reduction <add>, %214, %cst_48 [2] : vector<1x32x32xf32> to vector<1x32xf32>
    %216 = vector.shape_cast %215 : vector<1x32xf32> to vector<1x32x1xf32>
    %cst_49 = arith.constant 3.200000e+01 : f32
    %217 = vector.broadcast %cst_49 : f32 to vector<1x32x1xf32>
    %218 = arith.divf %216, %217 : vector<1x32x1xf32>
    %219 = vector.broadcast %209 : vector<1x32x1xf32> to vector<1x32x32xf32>
    %220 = arith.subf %201, %219 : vector<1x32x32xf32>
    %cst_50 = arith.constant 9.99999974E-6 : f32
    %221 = vector.broadcast %cst_50 : f32 to vector<1x32x1xf32>
    %222 = arith.addf %218, %221 : vector<1x32x1xf32>
    %223 = math.rsqrt %222 : vector<1x32x1xf32>
    %224 = vector.broadcast %223 : vector<1x32x1xf32> to vector<1x32x32xf32>
    %225 = arith.mulf %220, %224 : vector<1x32x32xf32>
    %226 = vector.shape_cast %203 : vector<32xf32> to vector<1x1x32xf32>
    %227 = vector.broadcast %226 : vector<1x1x32xf32> to vector<1x32x32xf32>
    %228 = arith.mulf %225, %227 : vector<1x32x32xf32>
    %229 = vector.shape_cast %205 : vector<32xf32> to vector<1x1x32xf32>
    %230 = vector.broadcast %229 : vector<1x1x32xf32> to vector<1x32x32xf32>
    %231 = arith.addf %228, %230 : vector<1x32x32xf32>
    %c0_51 = arith.constant 0 : index
    %c0_52 = arith.constant 0 : index
    %c0_53 = arith.constant 0 : index
    %232 = vector.load %arg11[%c0_51, %c0_52, %c0_53] : memref<1x32x32xf32, #tpu.memory_space<vmem>>, vector<1x32x32xf32>
    tpu.vector_store %arg11[%c0_51, %c0_52, %c0_53], %231 {strides = array<i32>} : memref<1x32x32xf32, #tpu.memory_space<vmem>>, vector<1x32x32xf32>,
    return
  }
  func.func @transform_0(%arg0: i32) -> (i32, i32, i32) {
    %c0_i32 = arith.constant 0 : i32
    %c0_i32_0 = arith.constant 0 : i32
    %c0_i32_1 = arith.constant 0 : i32
    return %arg0, %c0_i32, %c0_i32_0 : i32, i32, i32
  }
  func.func @transform_1(%arg0: i32) -> (i32, i32) {
    %c0_i32 = arith.constant 0 : i32
    %c0_i32_0 = arith.constant 0 : i32
    %c0_i32_1 = arith.constant 0 : i32
    return %c0_i32, %c0_i32_0 : i32, i32
  }
  func.func @transform_2(%arg0: i32) -> (i32, i32) {
    %c0_i32 = arith.constant 0 : i32
    %c0_i32_0 = arith.constant 0 : i32
    %c0_i32_1 = arith.constant 0 : i32
    return %c0_i32, %c0_i32_0 : i32, i32
  }
  func.func @transform_3(%arg0: i32) -> (i32, i32) {
    %c0_i32 = arith.constant 0 : i32
    %c0_i32_0 = arith.constant 0 : i32
    %c0_i32_1 = arith.constant 0 : i32
    return %c0_i32, %c0_i32_0 : i32, i32
  }
  func.func @transform_4(%arg0: i32) -> (i32, i32) {
    %c0_i32 = arith.constant 0 : i32
    %c0_i32_0 = arith.constant 0 : i32
    %c0_i32_1 = arith.constant 0 : i32
    return %c0_i32, %c0_i32_0 : i32, i32
  }
  func.func @transform_5(%arg0: i32) -> (i32, i32) {
    %c0_i32 = arith.constant 0 : i32
    %c0_i32_0 = arith.constant 0 : i32
    %c0_i32_1 = arith.constant 0 : i32
    return %c0_i32, %c0_i32_0 : i32, i32
  }
  func.func @transform_6(%arg0: i32) -> (i32, i32) {
    %c0_i32 = arith.constant 0 : i32
    %c0_i32_0 = arith.constant 0 : i32
    %c0_i32_1 = arith.constant 0 : i32
    return %c0_i32, %c0_i32_0 : i32, i32
  }
  func.func @transform_7(%arg0: i32) -> (i32, i32) {
    %c0_i32 = arith.constant 0 : i32
    %c0_i32_0 = arith.constant 0 : i32
    %c0_i32_1 = arith.constant 0 : i32
    return %c0_i32, %c0_i32_0 : i32, i32
  }
  func.func @transform_8(%arg0: i32) -> (i32, i32) {
    %c0_i32 = arith.constant 0 : i32
    %c0_i32_0 = arith.constant 0 : i32
    %c0_i32_1 = arith.constant 0 : i32
    return %c0_i32, %c0_i32_0 : i32, i32
  }
  func.func @transform_9(%arg0: i32) -> (i32, i32) {
    %c0_i32 = arith.constant 0 : i32
    %c0_i32_0 = arith.constant 0 : i32
    %c0_i32_1 = arith.constant 0 : i32
    return %c0_i32, %c0_i32_0 : i32, i32
  }
  func.func @transform_10(%arg0: i32) -> (i32, i32, i32) {
    %c0_i32 = arith.constant 0 : i32
    %c0_i32_0 = arith.constant 0 : i32
    %c0_i32_1 = arith.constant 0 : i32
    return %arg0, %c0_i32, %c0_i32_0 : i32, i32, i32
  }
}

</mosaic_0001>

<llo_original>
// kernel: tpu_custom_call.1
$region0: #{tpu_custom_call.1}
  #allocation0 [shape = 'u32[]', space=smem, size = 0x4, offset = 0x4, fixed_abs, tag = 'smem constant byte address 0x4 - core index']
  #allocation1 [shape = 'u32[72,128]{1,0:T(1,128)}', space=vmem, size = 0x9000, scoped, tag = 'internal scratch']
  %s0 = inlined_call_operand.hbm [shape: f32[2,32,32], index: 0, kind: input, shape index: {}]
  %s1 = inlined_call_operand.vmem [shape: bf16[32,96], index: 1, kind: input, shape index: {}]
  %s2 = inlined_call_operand.vmem [shape: bf16[32,32], index: 2, kind: input, shape index: {}]
  %s3 = inlined_call_operand.vmem [shape: bf16[32,96], index: 3, kind: input, shape index: {}]
  %s4 = inlined_call_operand.hbm [shape: bf16[32,32], index: 4, kind: input, shape index: {}]
  %s5 = inlined_call_operand.hbm [shape: bf16[32,64], index: 5, kind: input, shape index: {}]
  %s6 = inlined_call_operand.vmem [shape: bf16[64,32], index: 6, kind: input, shape index: {}]
  %s7 = inlined_call_operand.vmem [shape: f32[2,96], index: 7, kind: input, shape index: {}]
  %s8 = inlined_call_operand.vmem [shape: f32[1,64], index: 8, kind: input, shape index: {}]
  %s9 = inlined_call_operand.hbm [shape: f32[9,32], index: 9, kind: input, shape index: {}]
  %s10 = inlined_call_operand.hbm [shape: f32[2,32,32], index: 10, kind: output, shape index: {}]
  %s11 = sld [smem:[#allocation0]]
  $region89: #{tpu_custom_call.1} parent=0
    _
  %s13 = ssub.s32 1, %s11
  %s14 = scalar_select 0, %s13, %s11
  $region1: #{tpu_custom_call.1} parent=0
    #allocation2 [shape = 'u8[32768]{0}', space=vmem, size = 0x8000, scoped, tag = 'input window, operand 0']
    #allocation3 [shape = 's32[2]{0}', space=sflag, size = 0x8, scoped, tag = 'scoped memory for tpu_custom_call.1']
    #allocation4 [shape = 's32[2]{0}', space=sflag, size = 0x8, scoped, tag = 'scoped memory for tpu_custom_call.1']
    #allocation5 [shape = 'u8[8192]{0}', space=vmem, size = 0x2000, scoped, tag = 'input window, operand 4, single buffered']
    #allocation6 [shape = 's32[1]{0}', space=sflag, size = 0x4, scoped, tag = 'scoped memory for tpu_custom_call.1']
    #allocation7 [shape = 'u8[8192]{0}', space=vmem, size = 0x2000, scoped, tag = 'input window, operand 5, single buffered']
    #allocation8 [shape = 'u8[8192]{0}', space=vmem, size = 0x2000, scoped, tag = 'input window, operand 9, single buffered']
    #allocation9 [shape = 's32[1]{0}', space=sflag, size = 0x4, scoped, tag = 'scoped memory for tpu_custom_call.1']
    #allocation10 [shape = 'u8[32768]{0}', space=vmem, size = 0x8000, scoped, tag = 'output window, operand 0']
    %15 = vsyncpa [#allocation3], 0
    %s16 = scalar_lea.sflag [#allocation3], 1
    %17 = vsyncpa %s16, 0
    %18 = vsyncpa [#allocation6], 0
    %19 = vsyncpa [#allocation9], 0
    %20 = vsyncpa [#allocation4], 0
    %s21 = scalar_lea.sflag [#allocation4], 1
    %22 = vsyncpa %s21, 0
    loop: start=0, step=1, limit=4
    $region2: #{tpu_custom_call.1} parent=1 // loop_pre_header
      _
    $region3: #{tpu_custom_call.1} parent=1 // loop_header
      %s24 = sphi 0, %s28
      %p25 = scmp.ge.s32.totalorder %s24, 4
      %s34 = sphi 0, %s36
      %s37 = sphi 0, %s34
      %s38 = sphi 0, %s37
      %s54 = sphi 0, %s38
      %s58 = sphi 0, %s58
      %s60 = sphi 0, %s58
      %s61 = sphi 0, %s60
      %s75 = sphi 0, %s61
      %s79 = sphi 0, %s79
      %s81 = sphi 0, %s79
      %s82 = sphi 0, %s81
      %s96 = sphi 0, %s82
      %s100 = sphi 0, %s100
      %s102 = sphi 0, %s100
      %s103 = sphi 0, %s102
      %s117 = sphi 0, %s103
      %s121 = sphi 0, %s121
      %s123 = sphi 0, %s121
      %s124 = sphi 0, %s123
      %s138 = sphi 0, %s124
      %s142 = sphi 0, %s142
      %s144 = sphi 0, %s142
      %s145 = sphi 0, %s144
      %s159 = sphi 0, %s145
      %s163 = sphi 0, %s163
      %s165 = sphi 0, %s163
      %s166 = sphi 0, %s165
      %s180 = sphi 0, %s166
      %s184 = sphi 0, %s184
      %s186 = sphi 0, %s184
      %s187 = sphi 0, %s186
      %s201 = sphi 0, %s187
      %s205 = sphi 0, %s205
      %s207 = sphi 0, %s205
      %s208 = sphi 0, %s207
      %s222 = sphi 0, %s208
      %s226 = sphi 0, %s226
      %s228 = sphi 0, %s226
      %s229 = sphi 0, %s228
      %s243 = sphi 0, %s229
      %s249 = sphi 0, %s251
      %s252 = sphi 0, %s249
      %s253 = sphi 0, %s252
      %s269 = sphi 0, %s253
    $region4: #{tpu_custom_call.1} parent=1 // loop_header_branch
      %27 = sbr.rel (%p25) target = $region8
    $region5: #{tpu_custom_call.1} parent=1 // loop_body
      %s29 = ssub.s32 %s24, 1
      %s30 = ssub.s32 %s24, 2
      %s31 = sadd.s32 %s24, 1
      %s32 = ssub.s32 %s24, %s31
      %p33 = scmp.eq.s32.totalorder %s32, 0
      %s35 = sadd.s32 %s34, 1
      %s36 = scalar_select %p33, %s34, %s35
      %p39 = pneg %p33
      %p40 = scmp.eq.s32.totalorder %s24, 1
      %p41 = por %p39, %p40
      %p42 = scmp.ne.s32.totalorder %s34, %s37
      %p43 = scmp.eq.s32.totalorder %s24, 0
      %p44 = por %p42, %p43
      %p45 = scmp.ne.s32.totalorder %s34, %s37
      %p46 = scmp.eq.s32.totalorder %s29, 1
      %p47 = por %p45, %p46
      %p48 = scmp.ne.s32.totalorder %s37, %s38
      %p49 = scmp.eq.s32.totalorder %s29, 0
      %p50 = por %p48, %p49
      %p51 = scmp.ne.s32.totalorder %s37, %s38
      %p52 = scmp.eq.s32.totalorder %s30, 1
      %p53 = por %p51, %p52
      %p55 = scmp.ne.s32.totalorder %s38, %s54
      %p56 = scmp.eq.s32.totalorder %s30, 0
      %p57 = por %p55, %p56
      %s59 = sadd.s32 %s58, 1
      %p62 = scmp.eq.s32.totalorder %s24, 1
      %p63 = scmp.ne.s32.totalorder %s58, %s60
      %p64 = scmp.eq.s32.totalorder %s24, 0
      %p65 = por %p63, %p64
      %p66 = scmp.ne.s32.totalorder %s58, %s60
      %p67 = scmp.eq.s32.totalorder %s29, 1
      %p68 = por %p66, %p67
      %p69 = scmp.ne.s32.totalorder %s60, %s61
      %p70 = scmp.eq.s32.totalorder %s29, 0
      %p71 = por %p69, %p70
      %p72 = scmp.ne.s32.totalorder %s60, %s61
      %p73 = scmp.eq.s32.totalorder %s30, 1
      %p74 = por %p72, %p73
      %p76 = scmp.ne.s32.totalorder %s61, %s75
      %p77 = scmp.eq.s32.totalorder %s30, 0
      %p78 = por %p76, %p77
      %s80 = sadd.s32 %s79, 1
      %p83 = scmp.eq.s32.totalorder %s24, 1
      %p84 = scmp.ne.s32.totalorder %s79, %s81
      %p85 = scmp.eq.s32.totalorder %s24, 0
      %p86 = por %p84, %p85
      %p87 = scmp.ne.s32.totalorder %s79, %s81
      %p88 = scmp.eq.s32.totalorder %s29, 1
      %p89 = por %p87, %p88
      %p90 = scmp.ne.s32.totalorder %s81, %s82
      %p91 = scmp.eq.s32.totalorder %s29, 0
      %p92 = por %p90, %p91
      %p93 = scmp.ne.s32.totalorder %s81, %s82
      %p94 = scmp.eq.s32.totalorder %s30, 1
      %p95 = por %p93, %p94
      %p97 = scmp.ne.s32.totalorder %s82, %s96
      %p98 = scmp.eq.s32.totalorder %s30, 0
      %p99 = por %p97, %p98
      %s101 = sadd.s32 %s100, 1
      %p104 = scmp.eq.s32.totalorder %s24, 1
      %p105 = scmp.ne.s32.totalorder %s100, %s102
      %p106 = scmp.eq.s32.totalorder %s24, 0
      %p107 = por %p105, %p106
      %p108 = scmp.ne.s32.totalorder %s100, %s102
      %p109 = scmp.eq.s32.totalorder %s29, 1
      %p110 = por %p108, %p109
      %p111 = scmp.ne.s32.totalorder %s102, %s103
      %p112 = scmp.eq.s32.totalorder %s29, 0
      %p113 = por %p111, %p112
      %p114 = scmp.ne.s32.totalorder %s102, %s103
      %p115 = scmp.eq.s32.totalorder %s30, 1
      %p116 = por %p114, %p115
      %p118 = scmp.ne.s32.totalorder %s103, %s117
      %p119 = scmp.eq.s32.totalorder %s30, 0
      %p120 = por %p118, %p119
      %s122 = sadd.s32 %s121, 1
      %p125 = scmp.eq.s32.totalorder %s24, 1
      %p126 = scmp.ne.s32.totalorder %s121, %s123
      %p127 = scmp.eq.s32.totalorder %s24, 0
      %p128 = por %p126, %p127
      %p129 = scmp.ne.s32.totalorder %s121, %s123
      %p130 = scmp.eq.s32.totalorder %s29, 1
      %p131 = por %p129, %p130
      %p132 = scmp.ne.s32.totalorder %s123, %s124
      %p133 = scmp.eq.s32.totalorder %s29, 0
      %p134 = por %p132, %p133
      %p135 = scmp.ne.s32.totalorder %s123, %s124
      %p136 = scmp.eq.s32.totalorder %s30, 1
      %p137 = por %p135, %p136
      %p139 = scmp.ne.s32.totalorder %s124, %s138
      %p140 = scmp.eq.s32.totalorder %s30, 0
      %p141 = por %p139, %p140
      %s143 = sadd.s32 %s142, 1
      %p146 = scmp.eq.s32.totalorder %s24, 1
      %p147 = scmp.ne.s32.totalorder %s142, %s144
      %p148 = scmp.eq.s32.totalorder %s24, 0
      %p149 = por %p147, %p148
      %p150 = scmp.ne.s32.totalorder %s142, %s144
      %p151 = scmp.eq.s32.totalorder %s29, 1
      %p152 = por %p150, %p151
      %p153 = scmp.ne.s32.totalorder %s144, %s145
      %p154 = scmp.eq.s32.totalorder %s29, 0
      %p155 = por %p153, %p154
      %p156 = scmp.ne.s32.totalorder %s144, %s145
      %p157 = scmp.eq.s32.totalorder %s30, 1
      %p158 = por %p156, %p157
      %p160 = scmp.ne.s32.totalorder %s145, %s159
      %p161 = scmp.eq.s32.totalorder %s30, 0
      %p162 = por %p160, %p161
      %s164 = sadd.s32 %s163, 1
      %p167 = scmp.eq.s32.totalorder %s24, 1
      %p168 = scmp.ne.s32.totalorder %s163, %s165
      %p169 = scmp.eq.s32.totalorder %s24, 0
      %p170 = por %p168, %p169
      %p171 = scmp.ne.s32.totalorder %s163, %s165
      %p172 = scmp.eq.s32.totalorder %s29, 1
      %p173 = por %p171, %p172
      %p174 = scmp.ne.s32.totalorder %s165, %s166
      %p175 = scmp.eq.s32.totalorder %s29, 0
      %p176 = por %p174, %p175
      %p177 = scmp.ne.s32.totalorder %s165, %s166
      %p178 = scmp.eq.s32.totalorder %s30, 1
      %p179 = por %p177, %p178
      %p181 = scmp.ne.s32.totalorder %s166, %s180
      %p182 = scmp.eq.s32.totalorder %s30, 0
      %p183 = por %p181, %p182
      %s185 = sadd.s32 %s184, 1
      %p188 = scmp.eq.s32.totalorder %s24, 1
      %p189 = scmp.ne.s32.totalorder %s184, %s186
      %p190 = scmp.eq.s32.totalorder %s24, 0
      %p191 = por %p189, %p190
      %p192 = scmp.ne.s32.totalorder %s184, %s186
      %p193 = scmp.eq.s32.totalorder %s29, 1
      %p194 = por %p192, %p193
      %p195 = scmp.ne.s32.totalorder %s186, %s187
      %p196 = scmp.eq.s32.totalorder %s29, 0
      %p197 = por %p195, %p196
      %p198 = scmp.ne.s32.totalorder %s186, %s187
      %p199 = scmp.eq.s32.totalorder %s30, 1
      %p200 = por %p198, %p199
      %p202 = scmp.ne.s32.totalorder %s187, %s201
      %p203 = scmp.eq.s32.totalorder %s30, 0
      %p204 = por %p202, %p203
      %s206 = sadd.s32 %s205, 1
      %p209 = scmp.eq.s32.totalorder %s24, 1
      %p210 = scmp.ne.s32.totalorder %s205, %s207
      %p211 = scmp.eq.s32.totalorder %s24, 0
      %p212 = por %p210, %p211
      %p213 = scmp.ne.s32.totalorder %s205, %s207
      %p214 = scmp.eq.s32.totalorder %s29, 1
      %p215 = por %p213, %p214
      %p216 = scmp.ne.s32.totalorder %s207, %s208
      %p217 = scmp.eq.s32.totalorder %s29, 0
      %p218 = por %p216, %p217
      %p219 = scmp.ne.s32.totalorder %s207, %s208
      %p220 = scmp.eq.s32.totalorder %s30, 1
      %p221 = por %p219, %p220
      %p223 = scmp.ne.s32.totalorder %s208, %s222
      %p224 = scmp.eq.s32.totalorder %s30, 0
      %p225 = por %p223, %p224
      %s227 = sadd.s32 %s226, 1
      %p230 = scmp.eq.s32.totalorder %s24, 1
      %p231 = scmp.ne.s32.totalorder %s226, %s228
      %p232 = scmp.eq.s32.totalorder %s24, 0
      %p233 = por %p231, %p232
      %p234 = scmp.ne.s32.totalorder %s226, %s228
      %p235 = scmp.eq.s32.totalorder %s29, 1
      %p236 = por %p234, %p235
      %p237 = scmp.ne.s32.totalorder %s228, %s229
      %p238 = scmp.eq.s32.totalorder %s29, 0
      %p239 = por %p237, %p238
      %p240 = scmp.ne.s32.totalorder %s228, %s229
      %p241 = scmp.eq.s32.totalorder %s30, 1
      %p242 = por %p240, %p241
      %p244 = scmp.ne.s32.totalorder %s229, %s243
      %p245 = scmp.eq.s32.totalorder %s30, 0
      %p246 = por %p244, %p245
      %s247 = ssub.s32 %s24, %s31
      %p248 = scmp.eq.s32.totalorder %s247, 0
      %s250 = sadd.s32 %s249, 1
      %s251 = scalar_select %p248, %s249, %s250
      %p254 = pneg %p248
      %p255 = scmp.eq.s32.totalorder %s24, 1
      %p256 = por %p254, %p255
      %p257 = scmp.ne.s32.totalorder %s249, %s252
      %p258 = scmp.eq.s32.totalorder %s24, 0
      %p259 = por %p257, %p258
      %p260 = scmp.ne.s32.totalorder %s249, %s252
      %p261 = scmp.eq.s32.totalorder %s29, 1
      %p262 = por %p260, %p261
      %p263 = scmp.ne.s32.totalorder %s252, %s253
      %p264 = scmp.eq.s32.totalorder %s29, 0
      %p265 = por %p263, %p264
      %p266 = scmp.ne.s32.totalorder %s252, %s253
      %p267 = scmp.eq.s32.totalorder %s30, 1
      %p268 = por %p266, %p267
      %p270 = scmp.ne.s32.totalorder %s253, %s269
      %p271 = scmp.eq.s32.totalorder %s30, 0
      %p272 = por %p270, %p271
      %p273 = scmp.le.s32.totalorder 1, %s24
      %p274 = scmp.lt.s32.totalorder %s24, 3
      %p275 = pnand %p273, %p274
      %p276 = pneg %p275
      // Predicated region
      $region9: #{tpu_custom_call.1} parent=5 // pred_check
        _
      $region10: #{tpu_custom_call.1} parent=5 // pred_check_branch
        %278 = sbr.rel (%p275) target = $region12
      $region11: #{tpu_custom_call.1} parent=5 // pred_region
        %s279 = ssub.s32 %s24, 1
        // Predicated region
        $region13: #{tpu_custom_call.1} parent=11 // pred_check
          %p280 = pneg %p71
        $region14: #{tpu_custom_call.1} parent=11 // pred_check_branch
          %282 = sbr.rel (%p280) target = $region16
        $region15: #{tpu_custom_call.1} parent=11 // pred_region
          _
        $region16: #{tpu_custom_call.1} parent=11 // pred_fallthru
          _
        // Predicated region
        $region17: #{tpu_custom_call.1} parent=11 // pred_check
          %p283 = pneg %p92
        $region18: #{tpu_custom_call.1} parent=11 // pred_check_branch
          %285 = sbr.rel (%p283) target = $region20
        $region19: #{tpu_custom_call.1} parent=11 // pred_region
          _
        $region20: #{tpu_custom_call.1} parent=11 // pred_fallthru
          _
        // Predicated region
        $region21: #{tpu_custom_call.1} parent=11 // pred_check
          %p286 = pneg %p113
        $region22: #{tpu_custom_call.1} parent=11 // pred_check_branch
          %288 = sbr.rel (%p286) target = $region24
        $region23: #{tpu_custom_call.1} parent=11 // pred_region
          _
        $region24: #{tpu_custom_call.1} parent=11 // pred_fallthru
          _
        // Predicated region
        $region25: #{tpu_custom_call.1} parent=11 // pred_check
          %p289 = pneg %p134
        $region26: #{tpu_custom_call.1} parent=11 // pred_check_branch
          %291 = sbr.rel (%p289) target = $region28
        $region27: #{tpu_custom_call.1} parent=11 // pred_region
          %293 = vsyncadd [#allocation6], 0
          %s294 = sshll.u32 %s4, 4
          %s295 = int_to_ptr.hbm [resolvable:$true] %s294
          %s296 = sshll.u32 [#allocation5], 4
          %s297 = int_to_ptr.vmem [resolvable:$true] %s296
          %302 = dma.hbm_to_vmem [thread:$0]  %s295, 256, %s297, [#allocation6], 64, 64, 4
        $region28: #{tpu_custom_call.1} parent=11 // pred_fallthru
          _
        // Predicated region
        $region29: #{tpu_custom_call.1} parent=11 // pred_check
          %p303 = pneg %p155
        $region30: #{tpu_custom_call.1} parent=11 // pred_check_branch
          %305 = sbr.rel (%p303) target = $region32
        $region31: #{tpu_custom_call.1} parent=11 // pred_region
          %307 = vsyncadd [#allocation6], 0
          %s308 = sshll.u32 %s5, 4
          %s309 = int_to_ptr.hbm [resolvable:$true] %s308
          %s310 = sshll.u32 [#allocation7], 4
          %s311 = int_to_ptr.vmem [resolvable:$true] %s310
          %316 = dma.hbm_to_vmem [thread:$0]  %s309, 256, %s311, [#allocation6], 64, 64, 4
        $region32: #{tpu_custom_call.1} parent=11 // pred_fallthru
          _
        // Predicated region
        $region33: #{tpu_custom_call.1} parent=11 // pred_check
          %p317 = pneg %p176
        $region34: #{tpu_custom_call.1} parent=11 // pred_check_branch
          %319 = sbr.rel (%p317) target = $region36
        $region35: #{tpu_custom_call.1} parent=11 // pred_region
          _
        $region36: #{tpu_custom_call.1} parent=11 // pred_fallthru
          _
        // Predicated region
        $region37: #{tpu_custom_call.1} parent=11 // pred_check
          %p320 = pneg %p197
        $region38: #{tpu_custom_call.1} parent=11 // pred_check_branch
          %322 = sbr.rel (%p320) target = $region40
        $region39: #{tpu_custom_call.1} parent=11 // pred_region
          _
        $region40: #{tpu_custom_call.1} parent=11 // pred_fallthru
          _
        // Predicated region
        $region41: #{tpu_custom_call.1} parent=11 // pred_check
          %p323 = pneg %p218
        $region42: #{tpu_custom_call.1} parent=11 // pred_check_branch
          %325 = sbr.rel (%p323) target = $region44
        $region43: #{tpu_custom_call.1} parent=11 // pred_region
          _
        $region44: #{tpu_custom_call.1} parent=11 // pred_fallthru
          _
        // Predicated region
        $region45: #{tpu_custom_call.1} parent=11 // pred_check
          %p326 = pneg %p239
        $region46: #{tpu_custom_call.1} parent=11 // pred_check_branch
          %328 = sbr.rel (%p326) target = $region48
        $region47: #{tpu_custom_call.1} parent=11 // pred_region
          %330 = vsyncadd [#allocation9], 0
          %s331 = sshll.u32 %s9, 4
          %s332 = int_to_ptr.hbm [resolvable:$true] %s331
          %s333 = sshll.u32 [#allocation8], 4
          %s334 = int_to_ptr.vmem [resolvable:$true] %s333
          %339 = dma.hbm_to_vmem [thread:$0]  %s332, 256, %s334, [#allocation9], 128, 128, 8
        $region48: #{tpu_custom_call.1} parent=11 // pred_fallthru
          _
      $region12: #{tpu_custom_call.1} parent=5 // pred_fallthru
        _
      %p340 = scmp.lt.s32.totalorder %s24, 2
      // Predicated region
      $region49: #{tpu_custom_call.1} parent=5 // pred_check
        %p341 = pneg %p340
      $region50: #{tpu_custom_call.1} parent=5 // pred_check_branch
        %343 = sbr.rel (%p341) target = $region52
      $region51: #{tpu_custom_call.1} parent=5 // pred_region
        // Predicated region
        $region53: #{tpu_custom_call.1} parent=51 // pred_check
          %p344 = pneg %p44
        $region54: #{tpu_custom_call.1} parent=51 // pred_check_branch
          %346 = sbr.rel (%p344) target = $region56
        $region55: #{tpu_custom_call.1} parent=51 // pred_region
          %s347 = sand.u32 %s34, 1
          %s348 = scalar_lea.sflag [#allocation3], %s347
          %s349 = sand.u32 %s34, 1
          %s350 = smul.addr %s349, 32
          %s351 = scalar_lea.vmem [#allocation2], %s350
          %353 = vsyncadd %s348, 0
          %s354 = smul.addr %s24, 4
          %s355 = smul.addr %s354, 8
          %s356 = scalar_lea.hbm %s0, %s355
          %s357 = sshll.u32 %s356, 4
          %s358 = int_to_ptr.hbm [resolvable:$true] %s357
          %s359 = sshll.u32 %s351, 4
          %s360 = int_to_ptr.vmem [resolvable:$true] %s359
          %365 = dma.hbm_to_vmem [thread:$0]  %s358, 512, %s360, %s348, 128, 128, 8
        $region56: #{tpu_custom_call.1} parent=51 // pred_fallthru
          _
      $region52: #{tpu_custom_call.1} parent=5 // pred_fallthru
        _
      %p366 = scmp.le.s32.totalorder 1, %s24
      %p367 = scmp.lt.s32.totalorder %s24, 3
      %p368 = pnand %p366, %p367
      %p369 = pneg %p368
      // Predicated region
      $region57: #{tpu_custom_call.1} parent=5 // pred_check
        _
      $region58: #{tpu_custom_call.1} parent=5 // pred_check_branch
        %371 = sbr.rel (%p368) target = $region60
      $region59: #{tpu_custom_call.1} parent=5 // pred_region
        %s372 = ssub.s32 %s24, 1
        %s373 = sand.u32 %s37, 1
        %s374 = scalar_lea.sflag [#allocation3], %s373
        %s375 = sand.u32 %s37, 1
        %s376 = smul.addr %s375, 32
        %s377 = scalar_lea.vmem [#allocation2], %s376
        // Predicated region
        $region61: #{tpu_custom_call.1} parent=59 // pred_check
          %p378 = pneg %p50
        $region62: #{tpu_custom_call.1} parent=59 // pred_check_branch
          %380 = sbr.rel (%p378) target = $region64
        $region63: #{tpu_custom_call.1} parent=59 // pred_region
          %382 = dma.done %s374, 512
        $region64: #{tpu_custom_call.1} parent=59 // pred_fallthru
          _
        // Predicated region
        $region65: #{tpu_custom_call.1} parent=59 // pred_check
          %p383 = pneg %p134
        $region66: #{tpu_custom_call.1} parent=59 // pred_check_branch
          %385 = sbr.rel (%p383) target = $region68
        $region67: #{tpu_custom_call.1} parent=59 // pred_region
          %387 = dma.done [#allocation6], 256
        $region68: #{tpu_custom_call.1} parent=59 // pred_fallthru
          _
        // Predicated region
        $region69: #{tpu_custom_call.1} parent=59 // pred_check
          %p388 = pneg %p155
        $region70: #{tpu_custom_call.1} parent=59 // pred_check_branch
          %390 = sbr.rel (%p388) target = $region72
        $region71: #{tpu_custom_call.1} parent=59 // pred_region
          %392 = dma.done [#allocation6], 256
        $region72: #{tpu_custom_call.1} parent=59 // pred_fallthru
          _
        // Predicated region
        $region73: #{tpu_custom_call.1} parent=59 // pred_check
          %p393 = pneg %p239
        $region74: #{tpu_custom_call.1} parent=59 // pred_check_branch
          %395 = sbr.rel (%p393) target = $region76
        $region75: #{tpu_custom_call.1} parent=59 // pred_region
          %397 = dma.done [#allocation9], 256
        $region76: #{tpu_custom_call.1} parent=59 // pred_fallthru
          _
        %s398 = sand.u32 %s37, 1
        %s399 = scalar_lea.sflag [#allocation3], %s398
        %s400 = sand.u32 %s37, 1
        %s401 = smul.addr %s400, 32
        %s402 = scalar_lea.vmem [#allocation2], %s401
        %p403 = pneg %p50
        %p404 = pneg %p47
        %p405 = pneg %p71
        %p406 = pneg %p68
        %p407 = pneg %p92
        %p408 = pneg %p89
        %p409 = pneg %p113
        %p410 = pneg %p110
        %p411 = pneg %p134
        %p412 = pneg %p131
        %p413 = pneg %p155
        %p414 = pneg %p152
        %p415 = pneg %p176
        %p416 = pneg %p173
        %p417 = pneg %p197
        %p418 = pneg %p194
        %p419 = pneg %p218
        %p420 = pneg %p215
        %p421 = pneg %p239
        %p422 = pneg %p236
        %p423 = pneg %p265
        %p424 = pneg %p262
        %s425 = sand.u32 %s252, 1
        %s426 = scalar_lea.sflag [#allocation4], %s425
        %s427 = sand.u32 %s252, 1
        %s428 = smul.addr %s427, 32
        %s429 = scalar_lea.vmem [#allocation10], %s428
        %v431 = vld [vmem:[%s377] sm:$0xff]
        %v432 = vld [vmem:[%s377 + $0x8] sm:$0xff]
        %v433 = vld [vmem:[%s377 + $0x10] sm:$0xff]
        %v434 = vld [vmem:[%s377 + $0x18] sm:$0xff]
        %v435 = vld [vmem:[#allocation8] sm:$0xff]
        %v436 = vld [vmem:[#allocation8 + $0x8] sm:$0x1]
        %v437 = vld [vmem:[%s7] sm:$0x3]
        %v438 = vpack.c.bf16 %v432, %v431
        %v439 = vpack.c.bf16 %v434, %v433
        %v440 = vld [vmem:[%s1] sm:$0xf]
        %v441 = vld [vmem:[%s1 + $0x4] sm:$0xf]
        %v442 = vld [vmem:[%s1 + $0x8] sm:$0xf]
        %v443 = vld [vmem:[%s1 + $0xc] sm:$0xf]
        %v444 = vperm.slane %v437, 0
        %v449 = vunpack.c.l.b16 %v440
        %v450 = vunpack.c.l.b16 %v441
        %v451 = vunpack.c.l.b16 %v442
        %v452 = vunpack.c.l.b16 %v443
        %v453 = vpack.c.b16 %v450, %v449
        %v454 = vpack.c.b16 %v452, %v451
        %vm457 = vcmask 261120
        %v459 = vsel %vm457, %v438, 0
        %v462 = vsel %vm457, %v439, 0
        %464 = vmatpush.bf16.msra.mxu0 0
        %465 = vmatpush.bf16.msra.mxu0 0
        %466 = vmatpush.bf16.msra.mxu0 0
        %467 = vmatpush.bf16.msra.mxu0 0
        %468 = vmatpush.bf16.msra.mxu0 0
        %469 = vmatpush.bf16.msra.mxu0 0
        %470 = vmatpush.bf16.msra.mxu0 %v454
        %471 = vmatpush.bf16.msra.mxu0 %v453
        %472 = vmatmul.bf16.gmra.mxu0 %v459
        %v473 = vpop.f32.mrf.mxu0
        %v474 = vadd.f32 %v444, %v473
        %v475 = vpop.f32.mrf.mxu0
        %v476 = vadd.f32 %v444, %v475
        %477 = vmatmul.bf16.gmra.mxu0 %v462
        %v478 = vpop.f32.mrf.mxu0
        %v479 = vadd.f32 %v444, %v478
        %v480 = vpop.f32.mrf.mxu0
        %v481 = vadd.f32 %v444, %v480
        %482 = vdwg.mxu0
        %487 = vrot.lane.b32.xlu0 %v474, 120
        %v488 = vpop.permute.xlu0 %487
        %489 = vrot.lane.b32.xlu0 %v476, 120
        %v490 = vpop.permute.xlu0 %489
        %491 = vrot.lane.b32.xlu0 %v479, 120
        %v492 = vpop.permute.xlu0 %491
        %493 = vrot.lane.b32.xlu0 %v481, 120
        %v494 = vpop.permute.xlu0 %493
        %499 = vrot.lane.b32.xlu0 %v474, 112
        %v500 = vpop.permute.xlu0 %499
        %501 = vrot.lane.b32.xlu0 %v476, 112
        %v502 = vpop.permute.xlu0 %501
        %503 = vrot.lane.b32.xlu0 %v479, 112
        %v504 = vpop.permute.xlu0 %503
        %505 = vrot.lane.b32.xlu0 %v481, 112
        %v506 = vpop.permute.xlu0 %505
        %511 = vrot.lane.b32.xlu0 %v474, 104
        %v512 = vpop.permute.xlu0 %511
        %513 = vrot.lane.b32.xlu0 %v476, 104
        %v514 = vpop.permute.xlu0 %513
        %515 = vrot.lane.b32.xlu0 %v479, 104
        %v516 = vpop.permute.xlu0 %515
        %517 = vrot.lane.b32.xlu0 %v481, 104
        %v518 = vpop.permute.xlu0 %517
        %v523 = vpack.c.bf16 %v474, %v474
        %v524 = vpack.c.bf16 %v476, %v476
        %v525 = vpack.c.bf16 %v479, %v479
        %v526 = vpack.c.bf16 %v481, %v481
        %v527 = vpack.c.bf16 %v488, %v488
        %v528 = vpack.c.bf16 %v490, %v490
        %v529 = vpack.c.bf16 %v492, %v492
        %v530 = vpack.c.bf16 %v494, %v494
        %v531 = vpack.c.bf16 %v500, %v500
        %v532 = vpack.c.bf16 %v502, %v502
        %v533 = vpack.c.bf16 %v504, %v504
        %v534 = vpack.c.bf16 %v506, %v506
        %v535 = vpack.c.bf16 %v512, %v512
        %v536 = vpack.c.bf16 %v514, %v514
        %v537 = vpack.c.bf16 %v516, %v516
        %v538 = vpack.c.bf16 %v518, %v518
        %v543 = vunpack.c.l.b16 %v523
        %v544 = vunpack.c.l.b16 %v524
        %v545 = vunpack.c.l.b16 %v525
        %v546 = vunpack.c.l.b16 %v526
        %v547 = vpack.c.b16 %v544, %v543
        %v548 = vpack.c.b16 %v546, %v545
        %549 = vrot.lane.b32.xlu0 %v547, 96
        %v550 = vpop.permute.xlu0 %549
        %551 = vrot.lane.b32.xlu0 %v548, 96
        %v552 = vpop.permute.xlu0 %551
        %vm553 = vcmask 64512
        %v555 = vsel %vm553, %v547, 0
        %v558 = vsel %vm553, %v548, 0
        %v561 = vsel %vm553, %v550, 0
        %v564 = vsel %vm553, %v552, 0
        %566 = vmatpush.bf16.xpose.msra.mxu0 0
        %567 = vmatpush.bf16.xpose.msra.mxu0 0
        %568 = vmatpush.bf16.xpose.msra.mxu0 0
        %569 = vmatpush.bf16.xpose.msra.mxu0 0
        %570 = vmatpush.bf16.xpose.msra.mxu0 0
        %571 = vmatpush.bf16.xpose.msra.mxu0 0
        %572 = vmatpush.bf16.xpose.msra.mxu0 %v564
        %573 = vmatpush.bf16.xpose.msra.mxu0 %v561
        %574 = vmatmul.bf16.gmra.mxu0 %v555
        %v575 = vpop.f32.mrf.mxu0
        %v576 = vadd.f32 0.0, %v575
        %v577 = vpop.f32.mrf.mxu0
        %v578 = vadd.f32 0.0, %v577
        %579 = vmatmul.bf16.gmra.mxu0 %v558
        %v580 = vpop.f32.mrf.mxu0
        %v581 = vadd.f32 0.0, %v580
        %v582 = vpop.f32.mrf.mxu0
        %v583 = vadd.f32 0.0, %v582
        %584 = vdwg.mxu0
        %v589 = vunpack.c.l.b16 %v527
        %v590 = vunpack.c.l.b16 %v528
        %v591 = vunpack.c.l.b16 %v529
        %v592 = vunpack.c.l.b16 %v530
        %v593 = vpack.c.b16 %v590, %v589
        %v594 = vpack.c.b16 %v592, %v591
        %595 = vrot.lane.b32.xlu0 %v593, 96
        %v596 = vpop.permute.xlu0 %595
        %597 = vrot.lane.b32.xlu0 %v594, 96
        %v598 = vpop.permute.xlu0 %597
        %v600 = vsel %vm553, %v593, 0
        %v603 = vsel %vm553, %v594, 0
        %v606 = vsel %vm553, %v596, 0
        %v609 = vsel %vm553, %v598, 0
        %611 = vmatpush.bf16.xpose.msra.mxu0 0
        %612 = vmatpush.bf16.xpose.msra.mxu0 0
        %613 = vmatpush.bf16.xpose.msra.mxu0 0
        %614 = vmatpush.bf16.xpose.msra.mxu0 0
        %615 = vmatpush.bf16.xpose.msra.mxu0 0
        %616 = vmatpush.bf16.xpose.msra.mxu0 0
        %617 = vmatpush.bf16.xpose.msra.mxu0 %v609
        %618 = vmatpush.bf16.xpose.msra.mxu0 %v606
        %619 = vmatmul.bf16.gmra.mxu0 %v600
        %v620 = vpop.f32.mrf.mxu0
        %v621 = vadd.f32 0.0, %v620
        %v622 = vpop.f32.mrf.mxu0
        %v623 = vadd.f32 0.0, %v622
        %624 = vmatmul.bf16.gmra.mxu0 %v603
        %v625 = vpop.f32.mrf.mxu0
        %v626 = vadd.f32 0.0, %v625
        %v627 = vpop.f32.mrf.mxu0
        %v628 = vadd.f32 0.0, %v627
        %629 = vdwg.mxu0
        %v634 = vunpack.c.l.b16 %v531
        %v635 = vunpack.c.l.b16 %v532
        %v636 = vunpack.c.l.b16 %v533
        %v637 = vunpack.c.l.b16 %v534
        %v638 = vpack.c.b16 %v635, %v634
        %v639 = vpack.c.b16 %v637, %v636
        %640 = vrot.lane.b32.xlu0 %v638, 96
        %v641 = vpop.permute.xlu0 %640
        %642 = vrot.lane.b32.xlu0 %v639, 96
        %v643 = vpop.permute.xlu0 %642
        %v645 = vsel %vm553, %v638, 0
        %v648 = vsel %vm553, %v639, 0
        %v651 = vsel %vm553, %v641, 0
        %v654 = vsel %vm553, %v643, 0
        %656 = vmatpush.bf16.xpose.msra.mxu0 0
        %657 = vmatpush.bf16.xpose.msra.mxu0 0
        %658 = vmatpush.bf16.xpose.msra.mxu0 0
        %659 = vmatpush.bf16.xpose.msra.mxu0 0
        %660 = vmatpush.bf16.xpose.msra.mxu0 0
        %661 = vmatpush.bf16.xpose.msra.mxu0 0
        %662 = vmatpush.bf16.xpose.msra.mxu0 %v654
        %663 = vmatpush.bf16.xpose.msra.mxu0 %v651
        %664 = vmatmul.bf16.gmra.mxu0 %v645
        %v665 = vpop.f32.mrf.mxu0
        %v666 = vadd.f32 0.0, %v665
        %v667 = vpop.f32.mrf.mxu0
        %v668 = vadd.f32 0.0, %v667
        %669 = vmatmul.bf16.gmra.mxu0 %v648
        %v670 = vpop.f32.mrf.mxu0
        %v671 = vadd.f32 0.0, %v670
        %v672 = vpop.f32.mrf.mxu0
        %v673 = vadd.f32 0.0, %v672
        %674 = vdwg.mxu0
        %v679 = vunpack.c.l.b16 %v535
        %v680 = vunpack.c.l.b16 %v536
        %v681 = vunpack.c.l.b16 %v537
        %v682 = vunpack.c.l.b16 %v538
        %v683 = vpack.c.b16 %v680, %v679
        %v684 = vpack.c.b16 %v682, %v681
        %685 = vrot.lane.b32.xlu0 %v683, 96
        %v686 = vpop.permute.xlu0 %685
        %687 = vrot.lane.b32.xlu0 %v684, 96
        %v688 = vpop.permute.xlu0 %687
        %v690 = vsel %vm553, %v683, 0
        %v693 = vsel %vm553, %v684, 0
        %v696 = vsel %vm553, %v686, 0
        %v699 = vsel %vm553, %v688, 0
        %701 = vmatpush.bf16.xpose.msra.mxu0 0
        %702 = vmatpush.bf16.xpose.msra.mxu0 0
        %703 = vmatpush.bf16.xpose.msra.mxu0 0
        %704 = vmatpush.bf16.xpose.msra.mxu0 0
        %705 = vmatpush.bf16.xpose.msra.mxu0 0
        %706 = vmatpush.bf16.xpose.msra.mxu0 0
        %707 = vmatpush.bf16.xpose.msra.mxu0 %v699
        %708 = vmatpush.bf16.xpose.msra.mxu0 %v696
        %709 = vmatmul.bf16.gmra.mxu0 %v690
        %v710 = vpop.f32.mrf.mxu0
        %v711 = vadd.f32 0.0, %v710
        %v712 = vpop.f32.mrf.mxu0
        %v713 = vadd.f32 0.0, %v712
        %714 = vmatmul.bf16.gmra.mxu0 %v693
        %v715 = vpop.f32.mrf.mxu0
        %v716 = vadd.f32 0.0, %v715
        %v717 = vpop.f32.mrf.mxu0
        %v718 = vadd.f32 0.0, %v717
        %719 = vdwg.mxu0
        %v720 = vmul.f32 %v576, 0.35355338
        %v721 = vmul.f32 %v578, 0.35355338
        %v722 = vmul.f32 %v581, 0.35355338
        %v723 = vmul.f32 %v583, 0.35355338
        %v724 = vmul.f32 %v621, 0.35355338
        %v725 = vmul.f32 %v623, 0.35355338
        %v726 = vmul.f32 %v626, 0.35355338
        %v727 = vmul.f32 %v628, 0.35355338
        %v728 = vmul.f32 %v666, 0.35355338
        %v729 = vmul.f32 %v668, 0.35355338
        %v730 = vmul.f32 %v671, 0.35355338
        %v731 = vmul.f32 %v673, 0.35355338
        %v732 = vmul.f32 %v711, 0.35355338
        %v733 = vmul.f32 %v713, 0.35355338
        %v734 = vmul.f32 %v716, 0.35355338
        %v735 = vmul.f32 %v718, 0.35355338
        %v736 = vsel %vm457, %v720, -inf
        %737 = vmax.xlane.f32.xlu0 %v736
        %v738 = vpop.xlane.xlu0 %737
        %v739 = vsel %vm457, %v721, -inf
        %740 = vmax.xlane.f32.xlu0 %v739
        %v741 = vpop.xlane.xlu0 %740
        %v742 = vsel %vm457, %v722, -inf
        %743 = vmax.xlane.f32.xlu0 %v742
        %v744 = vpop.xlane.xlu0 %743
        %v745 = vsel %vm457, %v723, -inf
        %746 = vmax.xlane.f32.xlu0 %v745
        %v747 = vpop.xlane.xlu0 %746
        %v748 = vsel %vm457, %v724, -inf
        %749 = vmax.xlane.f32.xlu0 %v748
        %v750 = vpop.xlane.xlu0 %749
        %v751 = vsel %vm457, %v725, -inf
        %752 = vmax.xlane.f32.xlu0 %v751
        %v753 = vpop.xlane.xlu0 %752
        %v754 = vsel %vm457, %v726, -inf
        %755 = vmax.xlane.f32.xlu0 %v754
        %v756 = vpop.xlane.xlu0 %755
        %v757 = vsel %vm457, %v727, -inf
        %758 = vmax.xlane.f32.xlu0 %v757
        %v759 = vpop.xlane.xlu0 %758
        %v760 = vsel %vm457, %v728, -inf
        %761 = vmax.xlane.f32.xlu0 %v760
        %v762 = vpop.xlane.xlu0 %761
        %v763 = vsel %vm457, %v729, -inf
        %764 = vmax.xlane.f32.xlu0 %v763
        %v765 = vpop.xlane.xlu0 %764
        %v766 = vsel %vm457, %v730, -inf
        %767 = vmax.xlane.f32.xlu0 %v766
        %v768 = vpop.xlane.xlu0 %767
        %v769 = vsel %vm457, %v731, -inf
        %770 = vmax.xlane.f32.xlu0 %v769
        %v771 = vpop.xlane.xlu0 %770
        %v772 = vsel %vm457, %v732, -inf
        %773 = vmax.xlane.f32.xlu0 %v772
        %v774 = vpop.xlane.xlu0 %773
        %v775 = vsel %vm457, %v733, -inf
        %776 = vmax.xlane.f32.xlu0 %v775
        %v777 = vpop.xlane.xlu0 %776
        %v778 = vsel %vm457, %v734, -inf
        %779 = vmax.xlane.f32.xlu0 %v778
        %v780 = vpop.xlane.xlu0 %779
        %v781 = vsel %vm457, %v735, -inf
        %782 = vmax.xlane.f32.xlu0 %v781
        %v783 = vpop.xlane.xlu0 %782
        %v784 = vsub.f32 %v720, %v738
        %v785 = vsub.f32 %v721, %v741
        %v786 = vsub.f32 %v722, %v744
        %v787 = vsub.f32 %v723, %v747
        %v788 = vsub.f32 %v724, %v750
        %v789 = vsub.f32 %v725, %v753
        %v790 = vsub.f32 %v726, %v756
        %v791 = vsub.f32 %v727, %v759
        %v792 = vsub.f32 %v728, %v762
        %v793 = vsub.f32 %v729, %v765
        %v794 = vsub.f32 %v730, %v768
        %v795 = vsub.f32 %v731, %v771
        %v796 = vsub.f32 %v732, %v774
        %v797 = vsub.f32 %v733, %v777
        %v798 = vsub.f32 %v734, %v780
        %v799 = vsub.f32 %v735, %v783
        %v800 = vmul.f32 %v784, 1.442695
        %v801 = vpow.pop %v800
        %v802 = vmul.f32 %v785, 1.442695
        %v803 = vpow.pop %v802
        %v804 = vmul.f32 %v786, 1.442695
        %v805 = vpow.pop %v804
        %v806 = vmul.f32 %v787, 1.442695
        %v807 = vpow.pop %v806
        %v808 = vmul.f32 %v788, 1.442695
        %v809 = vpow.pop %v808
        %v810 = vmul.f32 %v789, 1.442695
        %v811 = vpow.pop %v810
        %v812 = vmul.f32 %v790, 1.442695
        %v813 = vpow.pop %v812
        %v814 = vmul.f32 %v791, 1.442695
        %v815 = vpow.pop %v814
        %v816 = vmul.f32 %v792, 1.442695
        %v817 = vpow.pop %v816
        %v818 = vmul.f32 %v793, 1.442695
        %v819 = vpow.pop %v818
        %v820 = vmul.f32 %v794, 1.442695
        %v821 = vpow.pop %v820
        %v822 = vmul.f32 %v795, 1.442695
        %v823 = vpow.pop %v822
        %v824 = vmul.f32 %v796, 1.442695
        %v825 = vpow.pop %v824
        %v826 = vmul.f32 %v797, 1.442695
        %v827 = vpow.pop %v826
        %v828 = vmul.f32 %v798, 1.442695
        %v829 = vpow.pop %v828
        %v830 = vmul.f32 %v799, 1.442695
        %v831 = vpow.pop %v830
        %v832 = vsel %vm457, %v801, 0.0
        %833 = vadd.xlane.f32.xlu0 %v832
        %v834 = vpop.xlane.xlu0 %833
        %v835 = vsel %vm457, %v803, 0.0
        %836 = vadd.xlane.f32.xlu0 %v835
        %v837 = vpop.xlane.xlu0 %836
        %v838 = vsel %vm457, %v805, 0.0
        %839 = vadd.xlane.f32.xlu0 %v838
        %v840 = vpop.xlane.xlu0 %839
        %v841 = vsel %vm457, %v807, 0.0
        %842 = vadd.xlane.f32.xlu0 %v841
        %v843 = vpop.xlane.xlu0 %842
        %v844 = vsel %vm457, %v809, 0.0
        %845 = vadd.xlane.f32.xlu0 %v844
        %v846 = vpop.xlane.xlu0 %845
        %v847 = vsel %vm457, %v811, 0.0
        %848 = vadd.xlane.f32.xlu0 %v847
        %v849 = vpop.xlane.xlu0 %848
        %v850 = vsel %vm457, %v813, 0.0
        %851 = vadd.xlane.f32.xlu0 %v850
        %v852 = vpop.xlane.xlu0 %851
        %v853 = vsel %vm457, %v815, 0.0
        %854 = vadd.xlane.f32.xlu0 %v853
        %v855 = vpop.xlane.xlu0 %854
        %v856 = vsel %vm457, %v817, 0.0
        %857 = vadd.xlane.f32.xlu0 %v856
        %v858 = vpop.xlane.xlu0 %857
        %v859 = vsel %vm457, %v819, 0.0
        %860 = vadd.xlane.f32.xlu0 %v859
        %v861 = vpop.xlane.xlu0 %860
        %v862 = vsel %vm457, %v821, 0.0
        %863 = vadd.xlane.f32.xlu0 %v862
        %v864 = vpop.xlane.xlu0 %863
        %v865 = vsel %vm457, %v823, 0.0
        %866 = vadd.xlane.f32.xlu0 %v865
        %v867 = vpop.xlane.xlu0 %866
        %v868 = vsel %vm457, %v825, 0.0
        %869 = vadd.xlane.f32.xlu0 %v868
        %v870 = vpop.xlane.xlu0 %869
        %v871 = vsel %vm457, %v827, 0.0
        %872 = vadd.xlane.f32.xlu0 %v871
        %v873 = vpop.xlane.xlu0 %872
        %v874 = vsel %vm457, %v829, 0.0
        %875 = vadd.xlane.f32.xlu0 %v874
        %v876 = vpop.xlane.xlu0 %875
        %v877 = vsel %vm457, %v831, 0.0
        %878 = vadd.xlane.f32.xlu0 %v877
        %v879 = vpop.xlane.xlu0 %878
        %v880 = vrcp.pop %v834
        %v881 = vrcp.pop %v837
        %v882 = vrcp.pop %v840
        %v883 = vrcp.pop %v843
        %v884 = vrcp.pop %v846
        %v885 = vrcp.pop %v849
        %v886 = vrcp.pop %v852
        %v887 = vrcp.pop %v855
        %v888 = vrcp.pop %v858
        %v889 = vrcp.pop %v861
        %v890 = vrcp.pop %v864
        %v891 = vrcp.pop %v867
        %v892 = vrcp.pop %v870
        %v893 = vrcp.pop %v873
        %v894 = vrcp.pop %v876
        %v895 = vrcp.pop %v879
        %v896 = vmul.f32 %v801, %v880
        %v897 = vmul.f32 %v803, %v881
        %v898 = vmul.f32 %v805, %v882
        %v899 = vmul.f32 %v807, %v883
        %v900 = vmul.f32 %v809, %v884
        %v901 = vmul.f32 %v811, %v885
        %v902 = vmul.f32 %v813, %v886
        %v903 = vmul.f32 %v815, %v887
        %v904 = vmul.f32 %v817, %v888
        %v905 = vmul.f32 %v819, %v889
        %v906 = vmul.f32 %v821, %v890
        %v907 = vmul.f32 %v823, %v891
        %v908 = vmul.f32 %v825, %v892
        %v909 = vmul.f32 %v827, %v893
        %v910 = vmul.f32 %v829, %v894
        %v911 = vmul.f32 %v831, %v895
        %v912 = vpack.c.bf16 %v896, %v896
        %v913 = vpack.c.bf16 %v897, %v897
        %v914 = vpack.c.bf16 %v898, %v898
        %v915 = vpack.c.bf16 %v899, %v899
        %v916 = vpack.c.bf16 %v900, %v900
        %v917 = vpack.c.bf16 %v901, %v901
        %v918 = vpack.c.bf16 %v902, %v902
        %v919 = vpack.c.bf16 %v903, %v903
        %v920 = vpack.c.bf16 %v904, %v904
        %v921 = vpack.c.bf16 %v905, %v905
        %v922 = vpack.c.bf16 %v906, %v906
        %v923 = vpack.c.bf16 %v907, %v907
        %v924 = vpack.c.bf16 %v908, %v908
        %v925 = vpack.c.bf16 %v909, %v909
        %v926 = vpack.c.bf16 %v910, %v910
        %v927 = vpack.c.bf16 %v911, %v911
        %v932 = vunpack.c.l.b16 %v912
        %v933 = vunpack.c.l.b16 %v913
        %v934 = vunpack.c.l.b16 %v914
        %v935 = vunpack.c.l.b16 %v915
        %v936 = vpack.c.b16 %v933, %v932
        %v937 = vpack.c.b16 %v935, %v934
        %938 = vrot.lane.b32.xlu0 %v547, 64
        %v939 = vpop.permute.xlu0 %938
        %940 = vrot.lane.b32.xlu0 %v548, 64
        %v941 = vpop.permute.xlu0 %940
        %v945 = vsel %vm457, %v936, 0
        %v948 = vsel %vm457, %v937, 0
        %950 = vmatpush.bf16.msra.mxu0 0
        %951 = vmatpush.bf16.msra.mxu0 0
        %952 = vmatpush.bf16.msra.mxu0 0
        %953 = vmatpush.bf16.msra.mxu0 0
        %954 = vmatpush.bf16.msra.mxu0 0
        %955 = vmatpush.bf16.msra.mxu0 0
        %956 = vmatpush.bf16.msra.mxu0 %v941
        %957 = vmatpush.bf16.msra.mxu0 %v939
        %958 = vmatmul.bf16.gmra.mxu0 %v945
        %v959 = vpop.f32.mrf.mxu0
        %v960 = vadd.f32 0.0, %v959
        %v961 = vpop.f32.mrf.mxu0
        %v962 = vadd.f32 0.0, %v961
        %963 = vmatmul.bf16.gmra.mxu0 %v948
        %v964 = vpop.f32.mrf.mxu0
        %v965 = vadd.f32 0.0, %v964
        %v966 = vpop.f32.mrf.mxu0
        %v967 = vadd.f32 0.0, %v966
        %968 = vdwg.mxu0
        %v973 = vunpack.c.l.b16 %v916
        %v974 = vunpack.c.l.b16 %v917
        %v975 = vunpack.c.l.b16 %v918
        %v976 = vunpack.c.l.b16 %v919
        %v977 = vpack.c.b16 %v974, %v973
        %v978 = vpack.c.b16 %v976, %v975
        %979 = vrot.lane.b32.xlu0 %v593, 64
        %v980 = vpop.permute.xlu0 %979
        %981 = vrot.lane.b32.xlu0 %v594, 64
        %v982 = vpop.permute.xlu0 %981
        %v986 = vsel %vm457, %v977, 0
        %v989 = vsel %vm457, %v978, 0
        %991 = vmatpush.bf16.msra.mxu0 0
        %992 = vmatpush.bf16.msra.mxu0 0
        %993 = vmatpush.bf16.msra.mxu0 0
        %994 = vmatpush.bf16.msra.mxu0 0
        %995 = vmatpush.bf16.msra.mxu0 0
        %996 = vmatpush.bf16.msra.mxu0 0
        %997 = vmatpush.bf16.msra.mxu0 %v982
        %998 = vmatpush.bf16.msra.mxu0 %v980
        %999 = vmatmul.bf16.gmra.mxu0 %v986
        %v1000 = vpop.f32.mrf.mxu0
        %v1001 = vadd.f32 0.0, %v1000
        %v1002 = vpop.f32.mrf.mxu0
        %v1003 = vadd.f32 0.0, %v1002
        %1004 = vmatmul.bf16.gmra.mxu0 %v989
        %v1005 = vpop.f32.mrf.mxu0
        %v1006 = vadd.f32 0.0, %v1005
        %v1007 = vpop.f32.mrf.mxu0
        %v1008 = vadd.f32 0.0, %v1007
        %1009 = vdwg.mxu0
        %v1014 = vunpack.c.l.b16 %v920
        %v1015 = vunpack.c.l.b16 %v921
        %v1016 = vunpack.c.l.b16 %v922
        %v1017 = vunpack.c.l.b16 %v923
        %v1018 = vpack.c.b16 %v1015, %v1014
        %v1019 = vpack.c.b16 %v1017, %v1016
        %1020 = vrot.lane.b32.xlu0 %v638, 64
        %v1021 = vpop.permute.xlu0 %1020
        %1022 = vrot.lane.b32.xlu0 %v639, 64
        %v1023 = vpop.permute.xlu0 %1022
        %v1027 = vsel %vm457, %v1018, 0
        %v1030 = vsel %vm457, %v1019, 0
        %1032 = vmatpush.bf16.msra.mxu0 0
        %1033 = vmatpush.bf16.msra.mxu0 0
        %1034 = vmatpush.bf16.msra.mxu0 0
        %1035 = vmatpush.bf16.msra.mxu0 0
        %1036 = vmatpush.bf16.msra.mxu0 0
        %1037 = vmatpush.bf16.msra.mxu0 0
        %1038 = vmatpush.bf16.msra.mxu0 %v1023
        %1039 = vmatpush.bf16.msra.mxu0 %v1021
        %1040 = vmatmul.bf16.gmra.mxu0 %v1027
        %v1041 = vpop.f32.mrf.mxu0
        %v1042 = vadd.f32 0.0, %v1041
        %v1043 = vpop.f32.mrf.mxu0
        %v1044 = vadd.f32 0.0, %v1043
        %1045 = vmatmul.bf16.gmra.mxu0 %v1030
        %v1046 = vpop.f32.mrf.mxu0
        %v1047 = vadd.f32 0.0, %v1046
        %v1048 = vpop.f32.mrf.mxu0
        %v1049 = vadd.f32 0.0, %v1048
        %1050 = vdwg.mxu0
        %v1055 = vunpack.c.l.b16 %v924
        %v1056 = vunpack.c.l.b16 %v925
        %v1057 = vunpack.c.l.b16 %v926
        %v1058 = vunpack.c.l.b16 %v927
        %v1059 = vpack.c.b16 %v1056, %v1055
        %v1060 = vpack.c.b16 %v1058, %v1057
        %1061 = vrot.lane.b32.xlu0 %v683, 64
        %v1062 = vpop.permute.xlu0 %1061
        %1063 = vrot.lane.b32.xlu0 %v684, 64
        %v1064 = vpop.permute.xlu0 %1063
        %v1068 = vsel %vm457, %v1059, 0
        %v1071 = vsel %vm457, %v1060, 0
        %1073 = vmatpush.bf16.msra.mxu0 0
        %1074 = vmatpush.bf16.msra.mxu0 0
        %1075 = vmatpush.bf16.msra.mxu0 0
        %1076 = vmatpush.bf16.msra.mxu0 0
        %1077 = vmatpush.bf16.msra.mxu0 0
        %1078 = vmatpush.bf16.msra.mxu0 0
        %1079 = vmatpush.bf16.msra.mxu0 %v1064
        %1080 = vmatpush.bf16.msra.mxu0 %v1062
        %1081 = vmatmul.bf16.gmra.mxu0 %v1068
        %v1082 = vpop.f32.mrf.mxu0
        %v1083 = vadd.f32 0.0, %v1082
        %v1084 = vpop.f32.mrf.mxu0
        %v1085 = vadd.f32 0.0, %v1084
        %1086 = vmatmul.bf16.gmra.mxu0 %v1071
        %v1087 = vpop.f32.mrf.mxu0
        %v1088 = vadd.f32 0.0, %v1087
        %v1089 = vpop.f32.mrf.mxu0
        %v1090 = vadd.f32 0.0, %v1089
        %1091 = vdwg.mxu0
        %1096 = vrot.lane.b32.xlu0 %v1001, 8
        %v1097 = vpop.permute.xlu0 %1096
        %1098 = vrot.lane.b32.xlu0 %v1003, 8
        %v1099 = vpop.permute.xlu0 %1098
        %1100 = vrot.lane.b32.xlu0 %v1006, 8
        %v1101 = vpop.permute.xlu0 %1100
        %1102 = vrot.lane.b32.xlu0 %v1008, 8
        %v1103 = vpop.permute.xlu0 %1102
        %1112 = vrot.lane.b32.xlu0 %v1042, 16
        %v1113 = vpop.permute.xlu0 %1112
        %1114 = vrot.lane.b32.xlu0 %v1044, 16
        %v1115 = vpop.permute.xlu0 %1114
        %1116 = vrot.lane.b32.xlu0 %v1047, 16
        %v1117 = vpop.permute.xlu0 %1116
        %1118 = vrot.lane.b32.xlu0 %v1049, 16
        %v1119 = vpop.permute.xlu0 %1118
        %1128 = vrot.lane.b32.xlu0 %v1083, 24
        %v1129 = vpop.permute.xlu0 %1128
        %1130 = vrot.lane.b32.xlu0 %v1085, 24
        %v1131 = vpop.permute.xlu0 %1130
        %1132 = vrot.lane.b32.xlu0 %v1088, 24
        %v1133 = vpop.permute.xlu0 %1132
        %1134 = vrot.lane.b32.xlu0 %v1090, 24
        %v1135 = vpop.permute.xlu0 %1134
        %v1140 = vsel %vm553, %v960, %v1097
        %v1141 = vsel %vm553, %v962, %v1099
        %v1142 = vsel %vm553, %v965, %v1101
        %v1143 = vsel %vm553, %v967, %v1103
        %vm1144 = vcmask 130048
        %v1145 = vsel %vm1144, %v1140, %v1113
        %v1146 = vsel %vm1144, %v1141, %v1115
        %v1147 = vsel %vm1144, %v1142, %v1117
        %v1148 = vsel %vm1144, %v1143, %v1119
        %vm1149 = vcmask 195584
        %v1150 = vsel %vm1149, %v1145, %v1129
        %v1151 = vsel %vm1149, %v1146, %v1131
        %v1152 = vsel %vm1149, %v1147, %v1133
        %v1153 = vsel %vm1149, %v1148, %v1135
        %v1154 = vpack.c.bf16 %v1151, %v1150
        %v1155 = vpack.c.bf16 %v1153, %v1152
        %v1156 = vld [vmem:[%s2] sm:$0xf]
        %v1157 = vld [vmem:[%s2 + $0x4] sm:$0xf]
        %v1158 = vld [vmem:[%s2 + $0x8] sm:$0xf]
        %v1159 = vld [vmem:[%s2 + $0xc] sm:$0xf]
        %v1160 = vperm.slane %v435, 0
        %v1165 = vunpack.c.l.b16 %v1156
        %v1166 = vunpack.c.l.b16 %v1157
        %v1167 = vunpack.c.l.b16 %v1158
        %v1168 = vunpack.c.l.b16 %v1159
        %v1169 = vpack.c.b16 %v1166, %v1165
        %v1170 = vpack.c.b16 %v1168, %v1167
        %v1174 = vsel %vm457, %v1154, 0
        %v1177 = vsel %vm457, %v1155, 0
        %1179 = vmatpush.bf16.msra.mxu0 0
        %1180 = vmatpush.bf16.msra.mxu0 0
        %1181 = vmatpush.bf16.msra.mxu0 0
        %1182 = vmatpush.bf16.msra.mxu0 0
        %1183 = vmatpush.bf16.msra.mxu0 0
        %1184 = vmatpush.bf16.msra.mxu0 0
        %1185 = vmatpush.bf16.msra.mxu0 %v1170
        %1186 = vmatpush.bf16.msra.mxu0 %v1169
        %1187 = vmatmul.bf16.gmra.mxu0 %v1174
        %v1188 = vpop.f32.mrf.mxu0
        %v1189 = vadd.f32 %v1160, %v1188
        %v1190 = vpop.f32.mrf.mxu0
        %v1191 = vadd.f32 %v1160, %v1190
        %1192 = vmatmul.bf16.gmra.mxu0 %v1177
        %v1193 = vpop.f32.mrf.mxu0
        %v1194 = vadd.f32 %v1160, %v1193
        %v1195 = vpop.f32.mrf.mxu0
        %v1196 = vadd.f32 %v1160, %v1195
        %1197 = vdwg.mxu0
        %v1198 = vadd.f32 %v431, %v1189
        %v1199 = vadd.f32 %v432, %v1191
        %v1200 = vadd.f32 %v433, %v1194
        %v1201 = vadd.f32 %v434, %v1196
        %v1202 = vsel %vm457, %v1198, 0.0
        %1203 = vadd.xlane.f32.xlu0 %v1202
        %v1204 = vpop.xlane.xlu0 %1203
        %v1205 = vsel %vm457, %v1199, 0.0
        %1206 = vadd.xlane.f32.xlu0 %v1205
        %v1207 = vpop.xlane.xlu0 %1206
        %v1208 = vsel %vm457, %v1200, 0.0
        %1209 = vadd.xlane.f32.xlu0 %v1208
        %v1210 = vpop.xlane.xlu0 %1209
        %v1211 = vsel %vm457, %v1201, 0.0
        %1212 = vadd.xlane.f32.xlu0 %v1211
        %v1213 = vpop.xlane.xlu0 %1212
        %v1214 = vrcp.pop 32.0
        %v1215 = vmul.f32 32.0, %v1214
        %v1216 = vsub.f32 1.0, %v1215
        %v1217 = vmul.f32 %v1214, %v1216
        %v1218 = vadd.f32 %v1214, %v1217
        %vm1219 = vweird.f32 %v1214
        %v1220 = vsel %vm1219, %v1214, %v1218
        %v1221 = vmul.f32 %v1204, %v1220
        %v1222 = vmul.f32 %v1207, %v1220
        %v1223 = vmul.f32 %v1210, %v1220
        %v1224 = vmul.f32 %v1213, %v1220
        %v1225 = vsub.f32 %v1198, %v1221
        %v1226 = vsub.f32 %v1199, %v1222
        %v1227 = vsub.f32 %v1200, %v1223
        %v1228 = vsub.f32 %v1201, %v1224
        %v1229 = vmul.f32 %v1225, %v1225
        %v1230 = vmul.f32 %v1226, %v1226
        %v1231 = vmul.f32 %v1227, %v1227
        %v1232 = vmul.f32 %v1228, %v1228
        %v1233 = vsel %vm457, %v1229, 0.0
        %1234 = vadd.xlane.f32.xlu0 %v1233
        %v1235 = vpop.xlane.xlu0 %1234
        %v1236 = vsel %vm457, %v1230, 0.0
        %1237 = vadd.xlane.f32.xlu0 %v1236
        %v1238 = vpop.xlane.xlu0 %1237
        %v1239 = vsel %vm457, %v1231, 0.0
        %1240 = vadd.xlane.f32.xlu0 %v1239
        %v1241 = vpop.xlane.xlu0 %1240
        %v1242 = vsel %vm457, %v1232, 0.0
        %1243 = vadd.xlane.f32.xlu0 %v1242
        %v1244 = vpop.xlane.xlu0 %1243
        %v1245 = vmul.f32 %v1235, %v1220
        %v1246 = vmul.f32 %v1238, %v1220
        %v1247 = vmul.f32 %v1241, %v1220
        %v1248 = vmul.f32 %v1244, %v1220
        %v1249 = vadd.f32 %v1245, 1e-05
        %v1250 = vadd.f32 %v1246, 1e-05
        %v1251 = vadd.f32 %v1247, 1e-05
        %v1252 = vadd.f32 %v1248, 1e-05
        %v1253 = vrsqrt.pop %v1249
        %v1254 = vmul.f32 %v1253, %v1249
        %v1255 = vmul.f32 %v1254, %v1253
        %v1256 = vmul.f32 0.5, %v1255
        %v1257 = vsub.f32 1.5, %v1256
        %v1258 = vmul.f32 %v1253, %v1257
        %vm1259 = vweird.f32 %v1249
        %vm1260 = vweird.f32 %v1253
        %vm1261 = vmor %vm1259, %vm1260
        %v1262 = vsel %vm1261, %v1253, %v1258
        %v1263 = vrsqrt.pop %v1250
        %v1264 = vmul.f32 %v1263, %v1250
        %v1265 = vmul.f32 %v1264, %v1263
        %v1266 = vmul.f32 0.5, %v1265
        %v1267 = vsub.f32 1.5, %v1266
        %v1268 = vmul.f32 %v1263, %v1267
        %vm1269 = vweird.f32 %v1250
        %vm1270 = vweird.f32 %v1263
        %vm1271 = vmor %vm1269, %vm1270
        %v1272 = vsel %vm1271, %v1263, %v1268
        %v1273 = vrsqrt.pop %v1251
        %v1274 = vmul.f32 %v1273, %v1251
        %v1275 = vmul.f32 %v1274, %v1273
        %v1276 = vmul.f32 0.5, %v1275
        %v1277 = vsub.f32 1.5, %v1276
        %v1278 = vmul.f32 %v1273, %v1277
        %vm1279 = vweird.f32 %v1251
        %vm1280 = vweird.f32 %v1273
        %vm1281 = vmor %vm1279, %vm1280
        %v1282 = vsel %vm1281, %v1273, %v1278
        %v1283 = vrsqrt.pop %v1252
        %v1284 = vmul.f32 %v1283, %v1252
        %v1285 = vmul.f32 %v1284, %v1283
        %v1286 = vmul.f32 0.5, %v1285
        %v1287 = vsub.f32 1.5, %v1286
        %v1288 = vmul.f32 %v1283, %v1287
        %vm1289 = vweird.f32 %v1252
        %vm1290 = vweird.f32 %v1283
        %vm1291 = vmor %vm1289, %vm1290
        %v1292 = vsel %vm1291, %v1283, %v1288
        %v1293 = vmul.f32 %v1225, %v1262
        %v1294 = vmul.f32 %v1226, %v1272
        %v1295 = vmul.f32 %v1227, %v1282
        %v1296 = vmul.f32 %v1228, %v1292
        %v1297 = vperm.slane %v435, 3
        %v1298 = vmul.f32 %v1293, %v1297
        %v1299 = vmul.f32 %v1294, %v1297
        %v1300 = vmul.f32 %v1295, %v1297
        %v1301 = vmul.f32 %v1296, %v1297
        %v1302 = vperm.slane %v435, 4
        %v1303 = vadd.f32 %v1298, %v1302
        %v1304 = vadd.f32 %v1299, %v1302
        %v1305 = vadd.f32 %v1300, %v1302
        %v1306 = vadd.f32 %v1301, %v1302
        %v1307 = vpack.c.bf16 %v1304, %v1303
        %v1308 = vpack.c.bf16 %v1306, %v1305
        %v1309 = vld [vmem:[%s3] sm:$0xf]
        %v1310 = vld [vmem:[%s3 + $0x4] sm:$0xf]
        %v1311 = vld [vmem:[%s3 + $0x8] sm:$0xf]
        %v1312 = vld [vmem:[%s3 + $0xc] sm:$0xf]
        %v1313 = vperm.slane %v437, 1
        %v1318 = vunpack.c.l.b16 %v1309
        %v1319 = vunpack.c.l.b16 %v1310
        %v1320 = vunpack.c.l.b16 %v1311
        %v1321 = vunpack.c.l.b16 %v1312
        %v1322 = vpack.c.b16 %v1319, %v1318
        %v1323 = vpack.c.b16 %v1321, %v1320
        %v1327 = vsel %vm457, %v1307, 0
        %v1330 = vsel %vm457, %v1308, 0
        %1332 = vmatpush.bf16.msra.mxu0 0
        %1333 = vmatpush.bf16.msra.mxu0 0
        %1334 = vmatpush.bf16.msra.mxu0 0
        %1335 = vmatpush.bf16.msra.mxu0 0
        %1336 = vmatpush.bf16.msra.mxu0 0
        %1337 = vmatpush.bf16.msra.mxu0 0
        %1338 = vmatpush.bf16.msra.mxu0 %v1323
        %1339 = vmatpush.bf16.msra.mxu0 %v1322
        %1340 = vmatmul.bf16.gmra.mxu0 %v1327
        %v1341 = vpop.f32.mrf.mxu0
        %v1342 = vadd.f32 %v1313, %v1341
        %v1343 = vpop.f32.mrf.mxu0
        %v1344 = vadd.f32 %v1313, %v1343
        %1345 = vmatmul.bf16.gmra.mxu0 %v1330
        %v1346 = vpop.f32.mrf.mxu0
        %v1347 = vadd.f32 %v1313, %v1346
        %v1348 = vpop.f32.mrf.mxu0
        %v1349 = vadd.f32 %v1313, %v1348
        %1350 = vdwg.mxu0
        %1355 = vrot.lane.b32.xlu0 %v1342, 120
        %v1356 = vpop.permute.xlu0 %1355
        %1357 = vrot.lane.b32.xlu0 %v1344, 120
        %v1358 = vpop.permute.xlu0 %1357
        %1359 = vrot.lane.b32.xlu0 %v1347, 120
        %v1360 = vpop.permute.xlu0 %1359
        %1361 = vrot.lane.b32.xlu0 %v1349, 120
        %v1362 = vpop.permute.xlu0 %1361
        %1367 = vrot.lane.b32.xlu0 %v1342, 112
        %v1368 = vpop.permute.xlu0 %1367
        %1369 = vrot.lane.b32.xlu0 %v1344, 112
        %v1370 = vpop.permute.xlu0 %1369
        %1371 = vrot.lane.b32.xlu0 %v1347, 112
        %v1372 = vpop.permute.xlu0 %1371
        %1373 = vrot.lane.b32.xlu0 %v1349, 112
        %v1374 = vpop.permute.xlu0 %1373
        %1379 = vrot.lane.b32.xlu0 %v1342, 104
        %v1380 = vpop.permute.xlu0 %1379
        %1381 = vrot.lane.b32.xlu0 %v1344, 104
        %v1382 = vpop.permute.xlu0 %1381
        %1383 = vrot.lane.b32.xlu0 %v1347, 104
        %v1384 = vpop.permute.xlu0 %1383
        %1385 = vrot.lane.b32.xlu0 %v1349, 104
        %v1386 = vpop.permute.xlu0 %1385
        %v1391 = vpack.c.bf16 %v1342, %v1342
        %v1392 = vpack.c.bf16 %v1344, %v1344
        %v1393 = vpack.c.bf16 %v1347, %v1347
        %v1394 = vpack.c.bf16 %v1349, %v1349
        %v1395 = vpack.c.bf16 %v1356, %v1356
        %v1396 = vpack.c.bf16 %v1358, %v1358
        %v1397 = vpack.c.bf16 %v1360, %v1360
        %v1398 = vpack.c.bf16 %v1362, %v1362
        %v1399 = vpack.c.bf16 %v1368, %v1368
        %v1400 = vpack.c.bf16 %v1370, %v1370
        %v1401 = vpack.c.bf16 %v1372, %v1372
        %v1402 = vpack.c.bf16 %v1374, %v1374
        %v1403 = vpack.c.bf16 %v1380, %v1380
        %v1404 = vpack.c.bf16 %v1382, %v1382
        %v1405 = vpack.c.bf16 %v1384, %v1384
        %v1406 = vpack.c.bf16 %v1386, %v1386
        %v1411 = vunpack.c.l.b16 %v1391
        %v1412 = vunpack.c.l.b16 %v1392
        %v1413 = vunpack.c.l.b16 %v1393
        %v1414 = vunpack.c.l.b16 %v1394
        %v1415 = vpack.c.b16 %v1412, %v1411
        %v1416 = vpack.c.b16 %v1414, %v1413
        %1417 = vrot.lane.b32.xlu0 %v1415, 96
        %v1418 = vpop.permute.xlu0 %1417
        %1419 = vrot.lane.b32.xlu0 %v1416, 96
        %v1420 = vpop.permute.xlu0 %1419
        %v1422 = vsel %vm553, %v1415, 0
        %v1425 = vsel %vm553, %v1416, 0
        %v1428 = vsel %vm553, %v1418, 0
        %v1431 = vsel %vm553, %v1420, 0
        %1433 = vmatpush.bf16.xpose.msra.mxu0 0
        %1434 = vmatpush.bf16.xpose.msra.mxu0 0
        %1435 = vmatpush.bf16.xpose.msra.mxu0 0
        %1436 = vmatpush.bf16.xpose.msra.mxu0 0
        %1437 = vmatpush.bf16.xpose.msra.mxu0 0
        %1438 = vmatpush.bf16.xpose.msra.mxu0 0
        %1439 = vmatpush.bf16.xpose.msra.mxu0 %v1431
        %1440 = vmatpush.bf16.xpose.msra.mxu0 %v1428
        %1441 = vmatmul.bf16.gmra.mxu0 %v1422
        %v1442 = vpop.f32.mrf.mxu0
        %v1443 = vadd.f32 0.0, %v1442
        %v1444 = vpop.f32.mrf.mxu0
        %v1445 = vadd.f32 0.0, %v1444
        %1446 = vmatmul.bf16.gmra.mxu0 %v1425
        %v1447 = vpop.f32.mrf.mxu0
        %v1448 = vadd.f32 0.0, %v1447
        %v1449 = vpop.f32.mrf.mxu0
        %v1450 = vadd.f32 0.0, %v1449
        %1451 = vdwg.mxu0
        %v1456 = vunpack.c.l.b16 %v1395
        %v1457 = vunpack.c.l.b16 %v1396
        %v1458 = vunpack.c.l.b16 %v1397
        %v1459 = vunpack.c.l.b16 %v1398
        %v1460 = vpack.c.b16 %v1457, %v1456
        %v1461 = vpack.c.b16 %v1459, %v1458
        %1462 = vrot.lane.b32.xlu0 %v1460, 96
        %v1463 = vpop.permute.xlu0 %1462
        %1464 = vrot.lane.b32.xlu0 %v1461, 96
        %v1465 = vpop.permute.xlu0 %1464
        %v1467 = vsel %vm553, %v1460, 0
        %v1470 = vsel %vm553, %v1461, 0
        %v1473 = vsel %vm553, %v1463, 0
        %v1476 = vsel %vm553, %v1465, 0
        %1478 = vmatpush.bf16.xpose.msra.mxu0 0
        %1479 = vmatpush.bf16.xpose.msra.mxu0 0
        %1480 = vmatpush.bf16.xpose.msra.mxu0 0
        %1481 = vmatpush.bf16.xpose.msra.mxu0 0
        %1482 = vmatpush.bf16.xpose.msra.mxu0 0
        %1483 = vmatpush.bf16.xpose.msra.mxu0 0
        %1484 = vmatpush.bf16.xpose.msra.mxu0 %v1476
        %1485 = vmatpush.bf16.xpose.msra.mxu0 %v1473
        %1486 = vmatmul.bf16.gmra.mxu0 %v1467
        %v1487 = vpop.f32.mrf.mxu0
        %v1488 = vadd.f32 0.0, %v1487
        %v1489 = vpop.f32.mrf.mxu0
        %v1490 = vadd.f32 0.0, %v1489
        %1491 = vmatmul.bf16.gmra.mxu0 %v1470
        %v1492 = vpop.f32.mrf.mxu0
        %v1493 = vadd.f32 0.0, %v1492
        %v1494 = vpop.f32.mrf.mxu0
        %v1495 = vadd.f32 0.0, %v1494
        %1496 = vdwg.mxu0
        %v1501 = vunpack.c.l.b16 %v1399
        %v1502 = vunpack.c.l.b16 %v1400
        %v1503 = vunpack.c.l.b16 %v1401
        %v1504 = vunpack.c.l.b16 %v1402
        %v1505 = vpack.c.b16 %v1502, %v1501
        %v1506 = vpack.c.b16 %v1504, %v1503
        %1507 = vrot.lane.b32.xlu0 %v1505, 96
        %v1508 = vpop.permute.xlu0 %1507
        %1509 = vrot.lane.b32.xlu0 %v1506, 96
        %v1510 = vpop.permute.xlu0 %1509
        %v1512 = vsel %vm553, %v1505, 0
        %v1515 = vsel %vm553, %v1506, 0
        %v1518 = vsel %vm553, %v1508, 0
        %v1521 = vsel %vm553, %v1510, 0
        %1523 = vmatpush.bf16.xpose.msra.mxu0 0
        %1524 = vmatpush.bf16.xpose.msra.mxu0 0
        %1525 = vmatpush.bf16.xpose.msra.mxu0 0
        %1526 = vmatpush.bf16.xpose.msra.mxu0 0
        %1527 = vmatpush.bf16.xpose.msra.mxu0 0
        %1528 = vmatpush.bf16.xpose.msra.mxu0 0
        %1529 = vmatpush.bf16.xpose.msra.mxu0 %v1521
        %1530 = vmatpush.bf16.xpose.msra.mxu0 %v1518
        %1531 = vmatmul.bf16.gmra.mxu0 %v1512
        %v1532 = vpop.f32.mrf.mxu0
        %v1533 = vadd.f32 0.0, %v1532
        %v1534 = vpop.f32.mrf.mxu0
        %v1535 = vadd.f32 0.0, %v1534
        %1536 = vmatmul.bf16.gmra.mxu0 %v1515
        %v1537 = vpop.f32.mrf.mxu0
        %v1538 = vadd.f32 0.0, %v1537
        %v1539 = vpop.f32.mrf.mxu0
        %v1540 = vadd.f32 0.0, %v1539
        %1541 = vdwg.mxu0
        %v1546 = vunpack.c.l.b16 %v1403
        %v1547 = vunpack.c.l.b16 %v1404
        %v1548 = vunpack.c.l.b16 %v1405
        %v1549 = vunpack.c.l.b16 %v1406
        %v1550 = vpack.c.b16 %v1547, %v1546
        %v1551 = vpack.c.b16 %v1549, %v1548
        %1552 = vrot.lane.b32.xlu0 %v1550, 96
        %v1553 = vpop.permute.xlu0 %1552
        %1554 = vrot.lane.b32.xlu0 %v1551, 96
        %v1555 = vpop.permute.xlu0 %1554
        %v1557 = vsel %vm553, %v1550, 0
        %v1560 = vsel %vm553, %v1551, 0
        %v1563 = vsel %vm553, %v1553, 0
        %v1566 = vsel %vm553, %v1555, 0
        %1568 = vmatpush.bf16.xpose.msra.mxu0 0
        %1569 = vmatpush.bf16.xpose.msra.mxu0 0
        %1570 = vmatpush.bf16.xpose.msra.mxu0 0
        %1571 = vmatpush.bf16.xpose.msra.mxu0 0
        %1572 = vmatpush.bf16.xpose.msra.mxu0 0
        %1573 = vmatpush.bf16.xpose.msra.mxu0 0
        %1574 = vmatpush.bf16.xpose.msra.mxu0 %v1566
        %1575 = vmatpush.bf16.xpose.msra.mxu0 %v1563
        %1576 = vmatmul.bf16.gmra.mxu0 %v1557
        %v1577 = vpop.f32.mrf.mxu0
        %v1578 = vadd.f32 0.0, %v1577
        %v1579 = vpop.f32.mrf.mxu0
        %v1580 = vadd.f32 0.0, %v1579
        %1581 = vmatmul.bf16.gmra.mxu0 %v1560
        %v1582 = vpop.f32.mrf.mxu0
        %v1583 = vadd.f32 0.0, %v1582
        %v1584 = vpop.f32.mrf.mxu0
        %v1585 = vadd.f32 0.0, %v1584
        %1586 = vdwg.mxu0
        %v1587 = vmul.f32 %v1443, 0.35355338
        %v1588 = vmul.f32 %v1445, 0.35355338
        %v1589 = vmul.f32 %v1448, 0.35355338
        %v1590 = vmul.f32 %v1450, 0.35355338
        %v1591 = vmul.f32 %v1488, 0.35355338
        %v1592 = vmul.f32 %v1490, 0.35355338
        %v1593 = vmul.f32 %v1493, 0.35355338
        %v1594 = vmul.f32 %v1495, 0.35355338
        %v1595 = vmul.f32 %v1533, 0.35355338
        %v1596 = vmul.f32 %v1535, 0.35355338
        %v1597 = vmul.f32 %v1538, 0.35355338
        %v1598 = vmul.f32 %v1540, 0.35355338
        %v1599 = vmul.f32 %v1578, 0.35355338
        %v1600 = vmul.f32 %v1580, 0.35355338
        %v1601 = vmul.f32 %v1583, 0.35355338
        %v1602 = vmul.f32 %v1585, 0.35355338
        %v1603 = vsel %vm457, %v1587, -inf
        %1604 = vmax.xlane.f32.xlu0 %v1603
        %v1605 = vpop.xlane.xlu0 %1604
        %v1606 = vsel %vm457, %v1588, -inf
        %1607 = vmax.xlane.f32.xlu0 %v1606
        %v1608 = vpop.xlane.xlu0 %1607
        %v1609 = vsel %vm457, %v1589, -inf
        %1610 = vmax.xlane.f32.xlu0 %v1609
        %v1611 = vpop.xlane.xlu0 %1610
        %v1612 = vsel %vm457, %v1590, -inf
        %1613 = vmax.xlane.f32.xlu0 %v1612
        %v1614 = vpop.xlane.xlu0 %1613
        %v1615 = vsel %vm457, %v1591, -inf
        %1616 = vmax.xlane.f32.xlu0 %v1615
        %v1617 = vpop.xlane.xlu0 %1616
        %v1618 = vsel %vm457, %v1592, -inf
        %1619 = vmax.xlane.f32.xlu0 %v1618
        %v1620 = vpop.xlane.xlu0 %1619
        %v1621 = vsel %vm457, %v1593, -inf
        %1622 = vmax.xlane.f32.xlu0 %v1621
        %v1623 = vpop.xlane.xlu0 %1622
        %v1624 = vsel %vm457, %v1594, -inf
        %1625 = vmax.xlane.f32.xlu0 %v1624
        %v1626 = vpop.xlane.xlu0 %1625
        %v1627 = vsel %vm457, %v1595, -inf
        %1628 = vmax.xlane.f32.xlu0 %v1627
        %v1629 = vpop.xlane.xlu0 %1628
        %v1630 = vsel %vm457, %v1596, -inf
        %1631 = vmax.xlane.f32.xlu0 %v1630
        %v1632 = vpop.xlane.xlu0 %1631
        %v1633 = vsel %vm457, %v1597, -inf
        %1634 = vmax.xlane.f32.xlu0 %v1633
        %v1635 = vpop.xlane.xlu0 %1634
        %v1636 = vsel %vm457, %v1598, -inf
        %1637 = vmax.xlane.f32.xlu0 %v1636
        %v1638 = vpop.xlane.xlu0 %1637
        %v1639 = vsel %vm457, %v1599, -inf
        %1640 = vmax.xlane.f32.xlu0 %v1639
        %v1641 = vpop.xlane.xlu0 %1640
        %v1642 = vsel %vm457, %v1600, -inf
        %1643 = vmax.xlane.f32.xlu0 %v1642
        %v1644 = vpop.xlane.xlu0 %1643
        %v1645 = vsel %vm457, %v1601, -inf
        %1646 = vmax.xlane.f32.xlu0 %v1645
        %v1647 = vpop.xlane.xlu0 %1646
        %v1648 = vsel %vm457, %v1602, -inf
        %1649 = vmax.xlane.f32.xlu0 %v1648
        %v1650 = vpop.xlane.xlu0 %1649
        %v1651 = vsub.f32 %v1587, %v1605
        %v1652 = vsub.f32 %v1588, %v1608
        %v1653 = vsub.f32 %v1589, %v1611
        %v1654 = vsub.f32 %v1590, %v1614
        %v1655 = vsub.f32 %v1591, %v1617
        %v1656 = vsub.f32 %v1592, %v1620
        %v1657 = vsub.f32 %v1593, %v1623
        %v1658 = vsub.f32 %v1594, %v1626
        %v1659 = vsub.f32 %v1595, %v1629
        %v1660 = vsub.f32 %v1596, %v1632
        %v1661 = vsub.f32 %v1597, %v1635
        %v1662 = vsub.f32 %v1598, %v1638
        %v1663 = vsub.f32 %v1599, %v1641
        %v1664 = vsub.f32 %v1600, %v1644
        %v1665 = vsub.f32 %v1601, %v1647
        %v1666 = vsub.f32 %v1602, %v1650
        %v1667 = vmul.f32 %v1651, 1.442695
        %v1668 = vpow.pop %v1667
        %v1669 = vmul.f32 %v1652, 1.442695
        %v1670 = vpow.pop %v1669
        %v1671 = vmul.f32 %v1653, 1.442695
        %v1672 = vpow.pop %v1671
        %v1673 = vmul.f32 %v1654, 1.442695
        %v1674 = vpow.pop %v1673
        %v1675 = vmul.f32 %v1655, 1.442695
        %v1676 = vpow.pop %v1675
        %v1677 = vmul.f32 %v1656, 1.442695
        %v1678 = vpow.pop %v1677
        %v1679 = vmul.f32 %v1657, 1.442695
        %v1680 = vpow.pop %v1679
        %v1681 = vmul.f32 %v1658, 1.442695
        %v1682 = vpow.pop %v1681
        %v1683 = vmul.f32 %v1659, 1.442695
        %v1684 = vpow.pop %v1683
        %v1685 = vmul.f32 %v1660, 1.442695
        %v1686 = vpow.pop %v1685
        %v1687 = vmul.f32 %v1661, 1.442695
        %v1688 = vpow.pop %v1687
        %v1689 = vmul.f32 %v1662, 1.442695
        %v1690 = vpow.pop %v1689
        %v1691 = vmul.f32 %v1663, 1.442695
        %v1692 = vpow.pop %v1691
        %v1693 = vmul.f32 %v1664, 1.442695
        %v1694 = vpow.pop %v1693
        %v1695 = vmul.f32 %v1665, 1.442695
        %v1696 = vpow.pop %v1695
        %v1697 = vmul.f32 %v1666, 1.442695
        %v1698 = vpow.pop %v1697
        %v1699 = vsel %vm457, %v1668, 0.0
        %1700 = vadd.xlane.f32.xlu0 %v1699
        %v1701 = vpop.xlane.xlu0 %1700
        %v1702 = vsel %vm457, %v1670, 0.0
        %1703 = vadd.xlane.f32.xlu0 %v1702
        %v1704 = vpop.xlane.xlu0 %1703
        %v1705 = vsel %vm457, %v1672, 0.0
        %1706 = vadd.xlane.f32.xlu0 %v1705
        %v1707 = vpop.xlane.xlu0 %1706
        %v1708 = vsel %vm457, %v1674, 0.0
        %1709 = vadd.xlane.f32.xlu0 %v1708
        %v1710 = vpop.xlane.xlu0 %1709
        %v1711 = vsel %vm457, %v1676, 0.0
        %1712 = vadd.xlane.f32.xlu0 %v1711
        %v1713 = vpop.xlane.xlu0 %1712
        %v1714 = vsel %vm457, %v1678, 0.0
        %1715 = vadd.xlane.f32.xlu0 %v1714
        %v1716 = vpop.xlane.xlu0 %1715
        %v1717 = vsel %vm457, %v1680, 0.0
        %1718 = vadd.xlane.f32.xlu0 %v1717
        %v1719 = vpop.xlane.xlu0 %1718
        %v1720 = vsel %vm457, %v1682, 0.0
        %1721 = vadd.xlane.f32.xlu0 %v1720
        %v1722 = vpop.xlane.xlu0 %1721
        %v1723 = vsel %vm457, %v1684, 0.0
        %1724 = vadd.xlane.f32.xlu0 %v1723
        %v1725 = vpop.xlane.xlu0 %1724
        %v1726 = vsel %vm457, %v1686, 0.0
        %1727 = vadd.xlane.f32.xlu0 %v1726
        %v1728 = vpop.xlane.xlu0 %1727
        %v1729 = vsel %vm457, %v1688, 0.0
        %1730 = vadd.xlane.f32.xlu0 %v1729
        %v1731 = vpop.xlane.xlu0 %1730
        %v1732 = vsel %vm457, %v1690, 0.0
        %1733 = vadd.xlane.f32.xlu0 %v1732
        %v1734 = vpop.xlane.xlu0 %1733
        %v1735 = vsel %vm457, %v1692, 0.0
        %1736 = vadd.xlane.f32.xlu0 %v1735
        %v1737 = vpop.xlane.xlu0 %1736
        %v1738 = vsel %vm457, %v1694, 0.0
        %1739 = vadd.xlane.f32.xlu0 %v1738
        %v1740 = vpop.xlane.xlu0 %1739
        %v1741 = vsel %vm457, %v1696, 0.0
        %1742 = vadd.xlane.f32.xlu0 %v1741
        %v1743 = vpop.xlane.xlu0 %1742
        %v1744 = vsel %vm457, %v1698, 0.0
        %1745 = vadd.xlane.f32.xlu0 %v1744
        %v1746 = vpop.xlane.xlu0 %1745
        %v1747 = vrcp.pop %v1701
        %v1748 = vrcp.pop %v1704
        %v1749 = vrcp.pop %v1707
        %v1750 = vrcp.pop %v1710
        %v1751 = vrcp.pop %v1713
        %v1752 = vrcp.pop %v1716
        %v1753 = vrcp.pop %v1719
        %v1754 = vrcp.pop %v1722
        %v1755 = vrcp.pop %v1725
        %v1756 = vrcp.pop %v1728
        %v1757 = vrcp.pop %v1731
        %v1758 = vrcp.pop %v1734
        %v1759 = vrcp.pop %v1737
        %v1760 = vrcp.pop %v1740
        %v1761 = vrcp.pop %v1743
        %v1762 = vrcp.pop %v1746
        %v1763 = vmul.f32 %v1668, %v1747
        %v1764 = vmul.f32 %v1670, %v1748
        %v1765 = vmul.f32 %v1672, %v1749
        %v1766 = vmul.f32 %v1674, %v1750
        %v1767 = vmul.f32 %v1676, %v1751
        %v1768 = vmul.f32 %v1678, %v1752
        %v1769 = vmul.f32 %v1680, %v1753
        %v1770 = vmul.f32 %v1682, %v1754
        %v1771 = vmul.f32 %v1684, %v1755
        %v1772 = vmul.f32 %v1686, %v1756
        %v1773 = vmul.f32 %v1688, %v1757
        %v1774 = vmul.f32 %v1690, %v1758
        %v1775 = vmul.f32 %v1692, %v1759
        %v1776 = vmul.f32 %v1694, %v1760
        %v1777 = vmul.f32 %v1696, %v1761
        %v1778 = vmul.f32 %v1698, %v1762
        %v1779 = vpack.c.bf16 %v1763, %v1763
        %v1780 = vpack.c.bf16 %v1764, %v1764
        %v1781 = vpack.c.bf16 %v1765, %v1765
        %v1782 = vpack.c.bf16 %v1766, %v1766
        %v1783 = vpack.c.bf16 %v1767, %v1767
        %v1784 = vpack.c.bf16 %v1768, %v1768
        %v1785 = vpack.c.bf16 %v1769, %v1769
        %v1786 = vpack.c.bf16 %v1770, %v1770
        %v1787 = vpack.c.bf16 %v1771, %v1771
        %v1788 = vpack.c.bf16 %v1772, %v1772
        %v1789 = vpack.c.bf16 %v1773, %v1773
        %v1790 = vpack.c.bf16 %v1774, %v1774
        %v1791 = vpack.c.bf16 %v1775, %v1775
        %v1792 = vpack.c.bf16 %v1776, %v1776
        %v1793 = vpack.c.bf16 %v1777, %v1777
        %v1794 = vpack.c.bf16 %v1778, %v1778
        %v1799 = vunpack.c.l.b16 %v1779
        %v1800 = vunpack.c.l.b16 %v1780
        %v1801 = vunpack.c.l.b16 %v1781
        %v1802 = vunpack.c.l.b16 %v1782
        %v1803 = vpack.c.b16 %v1800, %v1799
        %v1804 = vpack.c.b16 %v1802, %v1801
        %1805 = vrot.lane.b32.xlu0 %v1415, 64
        %v1806 = vpop.permute.xlu0 %1805
        %1807 = vrot.lane.b32.xlu0 %v1416, 64
        %v1808 = vpop.permute.xlu0 %1807
        %v1812 = vsel %vm457, %v1803, 0
        %v1815 = vsel %vm457, %v1804, 0
        %1817 = vmatpush.bf16.msra.mxu0 0
        %1818 = vmatpush.bf16.msra.mxu0 0
        %1819 = vmatpush.bf16.msra.mxu0 0
        %1820 = vmatpush.bf16.msra.mxu0 0
        %1821 = vmatpush.bf16.msra.mxu0 0
        %1822 = vmatpush.bf16.msra.mxu0 0
        %1823 = vmatpush.bf16.msra.mxu0 %v1808
        %1824 = vmatpush.bf16.msra.mxu0 %v1806
        %1825 = vmatmul.bf16.gmra.mxu0 %v1812
        %v1826 = vpop.f32.mrf.mxu0
        %v1827 = vadd.f32 0.0, %v1826
        %v1828 = vpop.f32.mrf.mxu0
        %v1829 = vadd.f32 0.0, %v1828
        %1830 = vmatmul.bf16.gmra.mxu0 %v1815
        %v1831 = vpop.f32.mrf.mxu0
        %v1832 = vadd.f32 0.0, %v1831
        %v1833 = vpop.f32.mrf.mxu0
        %v1834 = vadd.f32 0.0, %v1833
        %1835 = vdwg.mxu0
        %v1840 = vunpack.c.l.b16 %v1783
        %v1841 = vunpack.c.l.b16 %v1784
        %v1842 = vunpack.c.l.b16 %v1785
        %v1843 = vunpack.c.l.b16 %v1786
        %v1844 = vpack.c.b16 %v1841, %v1840
        %v1845 = vpack.c.b16 %v1843, %v1842
        %1846 = vrot.lane.b32.xlu0 %v1460, 64
        %v1847 = vpop.permute.xlu0 %1846
        %1848 = vrot.lane.b32.xlu0 %v1461, 64
        %v1849 = vpop.permute.xlu0 %1848
        %v1853 = vsel %vm457, %v1844, 0
        %v1856 = vsel %vm457, %v1845, 0
        %1858 = vmatpush.bf16.msra.mxu0 0
        %1859 = vmatpush.bf16.msra.mxu0 0
        %1860 = vmatpush.bf16.msra.mxu0 0
        %1861 = vmatpush.bf16.msra.mxu0 0
        %1862 = vmatpush.bf16.msra.mxu0 0
        %1863 = vmatpush.bf16.msra.mxu0 0
        %1864 = vmatpush.bf16.msra.mxu0 %v1849
        %1865 = vmatpush.bf16.msra.mxu0 %v1847
        %1866 = vmatmul.bf16.gmra.mxu0 %v1853
        %v1867 = vpop.f32.mrf.mxu0
        %v1868 = vadd.f32 0.0, %v1867
        %v1869 = vpop.f32.mrf.mxu0
        %v1870 = vadd.f32 0.0, %v1869
        %1871 = vmatmul.bf16.gmra.mxu0 %v1856
        %v1872 = vpop.f32.mrf.mxu0
        %v1873 = vadd.f32 0.0, %v1872
        %v1874 = vpop.f32.mrf.mxu0
        %v1875 = vadd.f32 0.0, %v1874
        %1876 = vdwg.mxu0
        %v1881 = vunpack.c.l.b16 %v1787
        %v1882 = vunpack.c.l.b16 %v1788
        %v1883 = vunpack.c.l.b16 %v1789
        %v1884 = vunpack.c.l.b16 %v1790
        %v1885 = vpack.c.b16 %v1882, %v1881
        %v1886 = vpack.c.b16 %v1884, %v1883
        %1887 = vrot.lane.b32.xlu0 %v1505, 64
        %v1888 = vpop.permute.xlu0 %1887
        %1889 = vrot.lane.b32.xlu0 %v1506, 64
        %v1890 = vpop.permute.xlu0 %1889
        %v1894 = vsel %vm457, %v1885, 0
        %v1897 = vsel %vm457, %v1886, 0
        %1899 = vmatpush.bf16.msra.mxu0 0
        %1900 = vmatpush.bf16.msra.mxu0 0
        %1901 = vmatpush.bf16.msra.mxu0 0
        %1902 = vmatpush.bf16.msra.mxu0 0
        %1903 = vmatpush.bf16.msra.mxu0 0
        %1904 = vmatpush.bf16.msra.mxu0 0
        %1905 = vmatpush.bf16.msra.mxu0 %v1890
        %1906 = vmatpush.bf16.msra.mxu0 %v1888
        %1907 = vmatmul.bf16.gmra.mxu0 %v1894
        %v1908 = vpop.f32.mrf.mxu0
        %v1909 = vadd.f32 0.0, %v1908
        %v1910 = vpop.f32.mrf.mxu0
        %v1911 = vadd.f32 0.0, %v1910
        %1912 = vmatmul.bf16.gmra.mxu0 %v1897
        %v1913 = vpop.f32.mrf.mxu0
        %v1914 = vadd.f32 0.0, %v1913
        %v1915 = vpop.f32.mrf.mxu0
        %v1916 = vadd.f32 0.0, %v1915
        %1917 = vdwg.mxu0
        %v1922 = vunpack.c.l.b16 %v1791
        %v1923 = vunpack.c.l.b16 %v1792
        %v1924 = vunpack.c.l.b16 %v1793
        %v1925 = vunpack.c.l.b16 %v1794
        %v1926 = vpack.c.b16 %v1923, %v1922
        %v1927 = vpack.c.b16 %v1925, %v1924
        %1928 = vrot.lane.b32.xlu0 %v1550, 64
        %v1929 = vpop.permute.xlu0 %1928
        %1930 = vrot.lane.b32.xlu0 %v1551, 64
        %v1931 = vpop.permute.xlu0 %1930
        %v1935 = vsel %vm457, %v1926, 0
        %v1938 = vsel %vm457, %v1927, 0
        %1940 = vmatpush.bf16.msra.mxu0 0
        %1941 = vmatpush.bf16.msra.mxu0 0
        %1942 = vmatpush.bf16.msra.mxu0 0
        %1943 = vmatpush.bf16.msra.mxu0 0
        %1944 = vmatpush.bf16.msra.mxu0 0
        %1945 = vmatpush.bf16.msra.mxu0 0
        %1946 = vmatpush.bf16.msra.mxu0 %v1931
        %1947 = vmatpush.bf16.msra.mxu0 %v1929
        %1948 = vmatmul.bf16.gmra.mxu0 %v1935
        %v1949 = vpop.f32.mrf.mxu0
        %v1950 = vadd.f32 0.0, %v1949
        %v1951 = vpop.f32.mrf.mxu0
        %v1952 = vadd.f32 0.0, %v1951
        %1953 = vmatmul.bf16.gmra.mxu0 %v1938
        %v1954 = vpop.f32.mrf.mxu0
        %v1955 = vadd.f32 0.0, %v1954
        %v1956 = vpop.f32.mrf.mxu0
        %v1957 = vadd.f32 0.0, %v1956
        %1958 = vdwg.mxu0
        %1963 = vrot.lane.b32.xlu0 %v1868, 8
        %v1964 = vpop.permute.xlu0 %1963
        %1965 = vrot.lane.b32.xlu0 %v1870, 8
        %v1966 = vpop.permute.xlu0 %1965
        %1967 = vrot.lane.b32.xlu0 %v1873, 8
        %v1968 = vpop.permute.xlu0 %1967
        %1969 = vrot.lane.b32.xlu0 %v1875, 8
        %v1970 = vpop.permute.xlu0 %1969
        %1979 = vrot.lane.b32.xlu0 %v1909, 16
        %v1980 = vpop.permute.xlu0 %1979
        %1981 = vrot.lane.b32.xlu0 %v1911, 16
        %v1982 = vpop.permute.xlu0 %1981
        %1983 = vrot.lane.b32.xlu0 %v1914, 16
        %v1984 = vpop.permute.xlu0 %1983
        %1985 = vrot.lane.b32.xlu0 %v1916, 16
        %v1986 = vpop.permute.xlu0 %1985
        %1995 = vrot.lane.b32.xlu0 %v1950, 24
        %v1996 = vpop.permute.xlu0 %1995
        %1997 = vrot.lane.b32.xlu0 %v1952, 24
        %v1998 = vpop.permute.xlu0 %1997
        %1999 = vrot.lane.b32.xlu0 %v1955, 24
        %v2000 = vpop.permute.xlu0 %1999
        %2001 = vrot.lane.b32.xlu0 %v1957, 24
        %v2002 = vpop.permute.xlu0 %2001
        %v2007 = vsel %vm553, %v1827, %v1964
        %v2008 = vsel %vm553, %v1829, %v1966
        %v2009 = vsel %vm553, %v1832, %v1968
        %v2010 = vsel %vm553, %v1834, %v1970
        %v2011 = vsel %vm1144, %v2007, %v1980
        %v2012 = vsel %vm1144, %v2008, %v1982
        %v2013 = vsel %vm1144, %v2009, %v1984
        %v2014 = vsel %vm1144, %v2010, %v1986
        %v2015 = vsel %vm1149, %v2011, %v1996
        %v2016 = vsel %vm1149, %v2012, %v1998
        %v2017 = vsel %vm1149, %v2013, %v2000
        %v2018 = vsel %vm1149, %v2014, %v2002
        %v2019 = vpack.c.bf16 %v2016, %v2015
        %v2020 = vpack.c.bf16 %v2018, %v2017
        %v2021 = vld [vmem:[#allocation5] sm:$0xf]
        %v2022 = vld [vmem:[#allocation5 + $0x4] sm:$0xf]
        %v2023 = vld [vmem:[#allocation5 + $0x8] sm:$0xf]
        %v2024 = vld [vmem:[#allocation5 + $0xc] sm:$0xf]
        %v2025 = vperm.slane %v435, 1
        %v2030 = vunpack.c.l.b16 %v2021
        %v2031 = vunpack.c.l.b16 %v2022
        %v2032 = vunpack.c.l.b16 %v2023
        %v2033 = vunpack.c.l.b16 %v2024
        %v2034 = vpack.c.b16 %v2031, %v2030
        %v2035 = vpack.c.b16 %v2033, %v2032
        %v2039 = vsel %vm457, %v2019, 0
        %v2042 = vsel %vm457, %v2020, 0
        %2044 = vmatpush.bf16.msra.mxu0 0
        %2045 = vmatpush.bf16.msra.mxu0 0
        %2046 = vmatpush.bf16.msra.mxu0 0
        %2047 = vmatpush.bf16.msra.mxu0 0
        %2048 = vmatpush.bf16.msra.mxu0 0
        %2049 = vmatpush.bf16.msra.mxu0 0
        %2050 = vmatpush.bf16.msra.mxu0 %v2035
        %2051 = vmatpush.bf16.msra.mxu0 %v2034
        %2052 = vmatmul.bf16.gmra.mxu0 %v2039
        %v2053 = vpop.f32.mrf.mxu0
        %v2054 = vadd.f32 %v2025, %v2053
        %v2055 = vpop.f32.mrf.mxu0
        %v2056 = vadd.f32 %v2025, %v2055
        %2057 = vmatmul.bf16.gmra.mxu0 %v2042
        %v2058 = vpop.f32.mrf.mxu0
        %v2059 = vadd.f32 %v2025, %v2058
        %v2060 = vpop.f32.mrf.mxu0
        %v2061 = vadd.f32 %v2025, %v2060
        %2062 = vdwg.mxu0
        %v2063 = vadd.f32 %v1303, %v2054
        %v2064 = vadd.f32 %v1304, %v2056
        %v2065 = vadd.f32 %v1305, %v2059
        %v2066 = vadd.f32 %v1306, %v2061
        %v2067 = vsel %vm457, %v2063, 0.0
        %2068 = vadd.xlane.f32.xlu0 %v2067
        %v2069 = vpop.xlane.xlu0 %2068
        %v2070 = vsel %vm457, %v2064, 0.0
        %2071 = vadd.xlane.f32.xlu0 %v2070
        %v2072 = vpop.xlane.xlu0 %2071
        %v2073 = vsel %vm457, %v2065, 0.0
        %2074 = vadd.xlane.f32.xlu0 %v2073
        %v2075 = vpop.xlane.xlu0 %2074
        %v2076 = vsel %vm457, %v2066, 0.0
        %2077 = vadd.xlane.f32.xlu0 %v2076
        %v2078 = vpop.xlane.xlu0 %2077
        %v2079 = vmul.f32 %v2069, %v1220
        %v2080 = vmul.f32 %v2072, %v1220
        %v2081 = vmul.f32 %v2075, %v1220
        %v2082 = vmul.f32 %v2078, %v1220
        %v2083 = vsub.f32 %v2063, %v2079
        %v2084 = vsub.f32 %v2064, %v2080
        %v2085 = vsub.f32 %v2065, %v2081
        %v2086 = vsub.f32 %v2066, %v2082
        %v2087 = vmul.f32 %v2083, %v2083
        %v2088 = vmul.f32 %v2084, %v2084
        %v2089 = vmul.f32 %v2085, %v2085
        %v2090 = vmul.f32 %v2086, %v2086
        %v2091 = vsel %vm457, %v2087, 0.0
        %2092 = vadd.xlane.f32.xlu0 %v2091
        %v2093 = vpop.xlane.xlu0 %2092
        %v2094 = vsel %vm457, %v2088, 0.0
        %2095 = vadd.xlane.f32.xlu0 %v2094
        %v2096 = vpop.xlane.xlu0 %2095
        %v2097 = vsel %vm457, %v2089, 0.0
        %2098 = vadd.xlane.f32.xlu0 %v2097
        %v2099 = vpop.xlane.xlu0 %2098
        %v2100 = vsel %vm457, %v2090, 0.0
        %2101 = vadd.xlane.f32.xlu0 %v2100
        %v2102 = vpop.xlane.xlu0 %2101
        %v2103 = vmul.f32 %v2093, %v1220
        %v2104 = vmul.f32 %v2096, %v1220
        %v2105 = vmul.f32 %v2099, %v1220
        %v2106 = vmul.f32 %v2102, %v1220
        %v2107 = vadd.f32 %v2103, 1e-05
        %v2108 = vadd.f32 %v2104, 1e-05
        %v2109 = vadd.f32 %v2105, 1e-05
        %v2110 = vadd.f32 %v2106, 1e-05
        %v2111 = vrsqrt.pop %v2107
        %v2112 = vmul.f32 %v2111, %v2107
        %v2113 = vmul.f32 %v2112, %v2111
        %v2114 = vmul.f32 0.5, %v2113
        %v2115 = vsub.f32 1.5, %v2114
        %v2116 = vmul.f32 %v2111, %v2115
        %vm2117 = vweird.f32 %v2107
        %vm2118 = vweird.f32 %v2111
        %vm2119 = vmor %vm2117, %vm2118
        %v2120 = vsel %vm2119, %v2111, %v2116
        %v2121 = vrsqrt.pop %v2108
        %v2122 = vmul.f32 %v2121, %v2108
        %v2123 = vmul.f32 %v2122, %v2121
        %v2124 = vmul.f32 0.5, %v2123
        %v2125 = vsub.f32 1.5, %v2124
        %v2126 = vmul.f32 %v2121, %v2125
        %vm2127 = vweird.f32 %v2108
        %vm2128 = vweird.f32 %v2121
        %vm2129 = vmor %vm2127, %vm2128
        %v2130 = vsel %vm2129, %v2121, %v2126
        %v2131 = vrsqrt.pop %v2109
        %v2132 = vmul.f32 %v2131, %v2109
        %v2133 = vmul.f32 %v2132, %v2131
        %v2134 = vmul.f32 0.5, %v2133
        %v2135 = vsub.f32 1.5, %v2134
        %v2136 = vmul.f32 %v2131, %v2135
        %vm2137 = vweird.f32 %v2109
        %vm2138 = vweird.f32 %v2131
        %vm2139 = vmor %vm2137, %vm2138
        %v2140 = vsel %vm2139, %v2131, %v2136
        %v2141 = vrsqrt.pop %v2110
        %v2142 = vmul.f32 %v2141, %v2110
        %v2143 = vmul.f32 %v2142, %v2141
        %v2144 = vmul.f32 0.5, %v2143
        %v2145 = vsub.f32 1.5, %v2144
        %v2146 = vmul.f32 %v2141, %v2145
        %vm2147 = vweird.f32 %v2110
        %vm2148 = vweird.f32 %v2141
        %vm2149 = vmor %vm2147, %vm2148
        %v2150 = vsel %vm2149, %v2141, %v2146
        %v2151 = vmul.f32 %v2083, %v2120
        %v2152 = vmul.f32 %v2084, %v2130
        %v2153 = vmul.f32 %v2085, %v2140
        %v2154 = vmul.f32 %v2086, %v2150
        %v2155 = vperm.slane %v435, 5
        %v2156 = vmul.f32 %v2151, %v2155
        %v2157 = vmul.f32 %v2152, %v2155
        %v2158 = vmul.f32 %v2153, %v2155
        %v2159 = vmul.f32 %v2154, %v2155
        %v2160 = vperm.slane %v435, 6
        %v2161 = vadd.f32 %v2156, %v2160
        %v2162 = vadd.f32 %v2157, %v2160
        %v2163 = vadd.f32 %v2158, %v2160
        %v2164 = vadd.f32 %v2159, %v2160
        %v2165 = vpack.c.bf16 %v2162, %v2161
        %v2166 = vpack.c.bf16 %v2164, %v2163
        %v2167 = vld [vmem:[#allocation7] sm:$0xf]
        %v2168 = vld [vmem:[#allocation7 + $0x4] sm:$0xf]
        %v2169 = vld [vmem:[#allocation7 + $0x8] sm:$0xf]
        %v2170 = vld [vmem:[#allocation7 + $0xc] sm:$0xf]
        %v2171 = vld [vmem:[%s8] sm:$0x1]
        %v2173 = vperm.slane %v2171, 0
        %v2179 = vunpack.c.l.b16 %v2167
        %v2180 = vunpack.c.l.b16 %v2168
        %v2181 = vunpack.c.l.b16 %v2169
        %v2182 = vunpack.c.l.b16 %v2170
        %v2183 = vpack.c.b16 %v2180, %v2179
        %v2184 = vpack.c.b16 %v2182, %v2181
        %v2188 = vsel %vm457, %v2165, 0
        %v2191 = vsel %vm457, %v2166, 0
        %2193 = vmatpush.bf16.msra.mxu0 0
        %2194 = vmatpush.bf16.msra.mxu0 0
        %2195 = vmatpush.bf16.msra.mxu0 0
        %2196 = vmatpush.bf16.msra.mxu0 0
        %2197 = vmatpush.bf16.msra.mxu0 0
        %2198 = vmatpush.bf16.msra.mxu0 0
        %2199 = vmatpush.bf16.msra.mxu0 %v2184
        %2200 = vmatpush.bf16.msra.mxu0 %v2183
        %2201 = vmatmul.bf16.gmra.mxu0 %v2188
        %v2202 = vpop.f32.mrf.mxu0
        %v2203 = vadd.f32 %v2173, %v2202
        %v2204 = vpop.f32.mrf.mxu0
        %v2205 = vadd.f32 %v2173, %v2204
        %2206 = vmatmul.bf16.gmra.mxu0 %v2191
        %v2207 = vpop.f32.mrf.mxu0
        %v2208 = vadd.f32 %v2173, %v2207
        %v2209 = vpop.f32.mrf.mxu0
        %v2210 = vadd.f32 %v2173, %v2209
        %2211 = vdwg.mxu0
        %v2212 = vmax.f32 %v2203, 0.0
        %v2213 = vmax.f32 %v2205, 0.0
        %v2214 = vmax.f32 %v2208, 0.0
        %v2215 = vmax.f32 %v2210, 0.0
        %v2216 = vpack.c.bf16 %v2213, %v2212
        %v2217 = vpack.c.bf16 %v2215, %v2214
        %v2218 = vld [vmem:[%s6] sm:$0xf]
        %v2219 = vld [vmem:[%s6 + $0x4] sm:$0xf]
        %v2220 = vld [vmem:[%s6 + $0x8] sm:$0xf]
        %v2221 = vld [vmem:[%s6 + $0xc] sm:$0xf]
        %v2222 = vld [vmem:[%s6 + $0x10] sm:$0xf]
        %v2223 = vld [vmem:[%s6 + $0x14] sm:$0xf]
        %v2224 = vld [vmem:[%s6 + $0x18] sm:$0xf]
        %v2225 = vld [vmem:[%s6 + $0x1c] sm:$0xf]
        %v2226 = vperm.slane %v435, 2
        %v2235 = vunpack.c.l.b16 %v2218
        %v2236 = vunpack.c.l.b16 %v2219
        %v2237 = vunpack.c.l.b16 %v2220
        %v2238 = vunpack.c.l.b16 %v2221
        %v2239 = vunpack.c.l.b16 %v2222
        %v2240 = vunpack.c.l.b16 %v2223
        %v2241 = vunpack.c.l.b16 %v2224
        %v2242 = vunpack.c.l.b16 %v2225
        %v2243 = vpack.c.b16 %v2236, %v2235
        %v2244 = vpack.c.b16 %v2238, %v2237
        %v2245 = vpack.c.b16 %v2240, %v2239
        %v2246 = vpack.c.b16 %v2242, %v2241
        %vm2251 = vcmask 523264
        %v2253 = vsel %vm2251, %v2216, 0
        %v2256 = vsel %vm2251, %v2217, 0
        %2258 = vmatpush.bf16.msra.mxu0 0
        %2259 = vmatpush.bf16.msra.mxu0 0
        %2260 = vmatpush.bf16.msra.mxu0 0
        %2261 = vmatpush.bf16.msra.mxu0 0
        %2262 = vmatpush.bf16.msra.mxu0 %v2246
        %2263 = vmatpush.bf16.msra.mxu0 %v2245
        %2264 = vmatpush.bf16.msra.mxu0 %v2244
        %2265 = vmatpush.bf16.msra.mxu0 %v2243
        %2266 = vmatmul.bf16.gmra.mxu0 %v2253
        %v2267 = vpop.f32.mrf.mxu0
        %v2268 = vadd.f32 %v2226, %v2267
        %v2269 = vpop.f32.mrf.mxu0
        %v2270 = vadd.f32 %v2226, %v2269
        %2271 = vmatmul.bf16.gmra.mxu0 %v2256
        %v2272 = vpop.f32.mrf.mxu0
        %v2273 = vadd.f32 %v2226, %v2272
        %v2274 = vpop.f32.mrf.mxu0
        %v2275 = vadd.f32 %v2226, %v2274
        %2276 = vdwg.mxu0
        %v2277 = vadd.f32 %v2161, %v2268
        %v2278 = vadd.f32 %v2162, %v2270
        %v2279 = vadd.f32 %v2163, %v2273
        %v2280 = vadd.f32 %v2164, %v2275
        %v2281 = vsel %vm457, %v2277, 0.0
        %2282 = vadd.xlane.f32.xlu0 %v2281
        %v2283 = vpop.xlane.xlu0 %2282
        %v2284 = vsel %vm457, %v2278, 0.0
        %2285 = vadd.xlane.f32.xlu0 %v2284
        %v2286 = vpop.xlane.xlu0 %2285
        %v2287 = vsel %vm457, %v2279, 0.0
        %2288 = vadd.xlane.f32.xlu0 %v2287
        %v2289 = vpop.xlane.xlu0 %2288
        %v2290 = vsel %vm457, %v2280, 0.0
        %2291 = vadd.xlane.f32.xlu0 %v2290
        %v2292 = vpop.xlane.xlu0 %2291
        %v2293 = vmul.f32 %v2283, %v1220
        %v2294 = vmul.f32 %v2286, %v1220
        %v2295 = vmul.f32 %v2289, %v1220
        %v2296 = vmul.f32 %v2292, %v1220
        %v2297 = vsub.f32 %v2277, %v2293
        %v2298 = vsub.f32 %v2278, %v2294
        %v2299 = vsub.f32 %v2279, %v2295
        %v2300 = vsub.f32 %v2280, %v2296
        %v2301 = vmul.f32 %v2297, %v2297
        %v2302 = vmul.f32 %v2298, %v2298
        %v2303 = vmul.f32 %v2299, %v2299
        %v2304 = vmul.f32 %v2300, %v2300
        %v2305 = vsel %vm457, %v2301, 0.0
        %2306 = vadd.xlane.f32.xlu0 %v2305
        %v2307 = vpop.xlane.xlu0 %2306
        %v2308 = vsel %vm457, %v2302, 0.0
        %2309 = vadd.xlane.f32.xlu0 %v2308
        %v2310 = vpop.xlane.xlu0 %2309
        %v2311 = vsel %vm457, %v2303, 0.0
        %2312 = vadd.xlane.f32.xlu0 %v2311
        %v2313 = vpop.xlane.xlu0 %2312
        %v2314 = vsel %vm457, %v2304, 0.0
        %2315 = vadd.xlane.f32.xlu0 %v2314
        %v2316 = vpop.xlane.xlu0 %2315
        %v2317 = vmul.f32 %v2307, %v1220
        %v2318 = vmul.f32 %v2310, %v1220
        %v2319 = vmul.f32 %v2313, %v1220
        %v2320 = vmul.f32 %v2316, %v1220
        %v2321 = vadd.f32 %v2317, 1e-05
        %v2322 = vadd.f32 %v2318, 1e-05
        %v2323 = vadd.f32 %v2319, 1e-05
        %v2324 = vadd.f32 %v2320, 1e-05
        %v2325 = vrsqrt.pop %v2321
        %v2326 = vmul.f32 %v2325, %v2321
        %v2327 = vmul.f32 %v2326, %v2325
        %v2328 = vmul.f32 0.5, %v2327
        %v2329 = vsub.f32 1.5, %v2328
        %v2330 = vmul.f32 %v2325, %v2329
        %vm2331 = vweird.f32 %v2321
        %vm2332 = vweird.f32 %v2325
        %vm2333 = vmor %vm2331, %vm2332
        %v2334 = vsel %vm2333, %v2325, %v2330
        %v2335 = vrsqrt.pop %v2322
        %v2336 = vmul.f32 %v2335, %v2322
        %v2337 = vmul.f32 %v2336, %v2335
        %v2338 = vmul.f32 0.5, %v2337
        %v2339 = vsub.f32 1.5, %v2338
        %v2340 = vmul.f32 %v2335, %v2339
        %vm2341 = vweird.f32 %v2322
        %vm2342 = vweird.f32 %v2335
        %vm2343 = vmor %vm2341, %vm2342
        %v2344 = vsel %vm2343, %v2335, %v2340
        %v2345 = vrsqrt.pop %v2323
        %v2346 = vmul.f32 %v2345, %v2323
        %v2347 = vmul.f32 %v2346, %v2345
        %v2348 = vmul.f32 0.5, %v2347
        %v2349 = vsub.f32 1.5, %v2348
        %v2350 = vmul.f32 %v2345, %v2349
        %vm2351 = vweird.f32 %v2323
        %vm2352 = vweird.f32 %v2345
        %vm2353 = vmor %vm2351, %vm2352
        %v2354 = vsel %vm2353, %v2345, %v2350
        %v2355 = vrsqrt.pop %v2324
        %v2356 = vmul.f32 %v2355, %v2324
        %v2357 = vmul.f32 %v2356, %v2355
        %v2358 = vmul.f32 0.5, %v2357
        %v2359 = vsub.f32 1.5, %v2358
        %v2360 = vmul.f32 %v2355, %v2359
        %vm2361 = vweird.f32 %v2324
        %vm2362 = vweird.f32 %v2355
        %vm2363 = vmor %vm2361, %vm2362
        %v2364 = vsel %vm2363, %v2355, %v2360
        %v2365 = vmul.f32 %v2297, %v2334
        %v2366 = vmul.f32 %v2298, %v2344
        %v2367 = vmul.f32 %v2299, %v2354
        %v2368 = vmul.f32 %v2300, %v2364
        %v2369 = vperm.slane %v435, 7
        %v2370 = vmul.f32 %v2365, %v2369
        %v2371 = vmul.f32 %v2366, %v2369
        %v2372 = vmul.f32 %v2367, %v2369
        %v2373 = vmul.f32 %v2368, %v2369
        %v2374 = vperm.slane %v436, 0
        %v2375 = vadd.f32 %v2370, %v2374
        %v2376 = vadd.f32 %v2371, %v2374
        %v2377 = vadd.f32 %v2372, %v2374
        %v2378 = vadd.f32 %v2373, %v2374
        %2379 = vst.msk [vmem:[%s429] sm:$0xff] %vm457, %v2375
        %2380 = vst.msk [vmem:[%s429 + $0x8] sm:$0xff] %vm457, %v2376
        %2381 = vst.msk [vmem:[%s429 + $0x10] sm:$0xff] %vm457, %v2377
        %2382 = vst.msk [vmem:[%s429 + $0x18] sm:$0xff] %vm457, %v2378
        %s2383 = sand.u32 %s252, 1
        %s2384 = scalar_lea.sflag [#allocation4], %s2383
        %s2385 = sand.u32 %s252, 1
        %s2386 = smul.addr %s2385, 32
        %s2387 = scalar_lea.vmem [#allocation10], %s2386
        // Predicated region
        $region77: #{tpu_custom_call.1} parent=59 // pred_check
          %p2388 = pneg %p262
        $region78: #{tpu_custom_call.1} parent=59 // pred_check_branch
          %2390 = sbr.rel (%p2388) target = $region80
        $region79: #{tpu_custom_call.1} parent=59 // pred_region
          %2392 = vsyncadd %s2384, 0
          %s2393 = smul.addr %s29, 4
          %s2394 = smul.addr %s2393, 8
          %s2395 = scalar_lea.hbm %s10, %s2394
          %s2396 = sshll.u32 %s2387, 4
          %s2397 = int_to_ptr.vmem [resolvable:$true] %s2396
          %s2398 = sshll.u32 %s2395, 4
          %s2399 = int_to_ptr.hbm [resolvable:$true] %s2398
          %2404 = dma.vmem_to_hbm [thread:$0]  %s2397, 512, %s2399, %s2384, 128, 128, 8
        $region80: #{tpu_custom_call.1} parent=59 // pred_fallthru
          _
      $region60: #{tpu_custom_call.1} parent=5 // pred_fallthru
        _
      %p2405 = scmp.le.s32.totalorder 2, %s24
      // Predicated region
      $region81: #{tpu_custom_call.1} parent=5 // pred_check
        %p2406 = pneg %p2405
      $region82: #{tpu_custom_call.1} parent=5 // pred_check_branch
        %2408 = sbr.rel (%p2406) target = $region84
      $region83: #{tpu_custom_call.1} parent=5 // pred_region
        %s2409 = ssub.s32 %s24, 2
        // Predicated region
        $region85: #{tpu_custom_call.1} parent=83 // pred_check
          %p2410 = pneg %p268
        $region86: #{tpu_custom_call.1} parent=83 // pred_check_branch
          %2412 = sbr.rel (%p2410) target = $region88
        $region87: #{tpu_custom_call.1} parent=83 // pred_region
          %s2413 = sand.u32 %s253, 1
          %s2414 = scalar_lea.sflag [#allocation4], %s2413
          %s2415 = sand.u32 %s253, 1
          %s2416 = smul.addr %s2415, 32
          %s2417 = scalar_lea.vmem [#allocation10], %s2416
          %2419 = dma.done %s2414, 512
        $region88: #{tpu_custom_call.1} parent=83 // pred_fallthru
          _
      $region84: #{tpu_custom_call.1} parent=5 // pred_fallthru
        _
    $region6: #{tpu_custom_call.1} parent=1 // loop_footer
      %s28 = sadd.s32 1, %s24
    $region7: #{tpu_custom_call.1} parent=1 // loop_footer_branch
      %23 = sbr.rel target = $region3
    $region8: #{tpu_custom_call.1} parent=1 // loop_exit
      _
    %2420 = vsyncpa [#allocation3], 1
    %s2421 = scalar_lea.sflag [#allocation3], 1
    %2422 = vsyncpa %s2421, 1
    %2423 = vsyncpa [#allocation6], 1
    %2424 = vsyncpa [#allocation9], 1
    %2425 = vsyncpa [#allocation4], 1
    %s2426 = scalar_lea.sflag [#allocation4], 1
    %2427 = vsyncpa %s2426, 1

</llo_original>
